<compile_context>
chip_gen: v7x
topology: tpu7x:2x2x1
jax: 0.10.0
libtpu: 0.0.40
codegen_flags: <defaults>
</compile_context>

<pallas_src>
import functools

import jax
import jax.numpy as jnp
import numpy as np
from jax.experimental import pallas as pl
from jax.experimental.pallas import tpu as pltpu


# ------------------------------ tiling choice ------------------------------ #

def _round_up(x, m):
    return ((x + m - 1) // m) * m


def _vmem_capacity_bytes():
    try:
        info = pltpu.get_tpu_info()
        return int(getattr(info, "vmem_capacity_bytes", 64 << 20))
    except Exception:
        return 64 << 20                      # conservative (v7x-sized) fallback


def _choose_tiles(n):
    """Pick (TR, TC, Npad, vmem_limit).

    TC (lane/column tile, multiple of 128) is made as large as the chip's VMEM
    and the padding waste allow, so the per-grid-step compute dwarfs the
    ~0.35 us step overhead.  TR (row tile, multiple of 8) is 128/256 and forms
    the 'parallel' megacore axis; the (TR, TC) f32 temporaries stay at a few
    MiB regardless of N."""
    vmem_cap = _vmem_capacity_bytes()
    tc_max = 2048 if vmem_cap >= (96 << 20) else 1024      # v7x: 64 MiB VMEM
    tc = 128
    for cand in (2048, 1024, 512, 256, 128):
        if cand > tc_max:
            continue
        waste = (-n) % cand
        if waste <= max(128, n // 8):        # cap column-padding waste ~12.5%
            tc = cand
            break
    npad = _round_up(n, tc)                  # multiple of tc (and of 128)
    tr = 256 if (npad % 256 == 0 and npad // 256 >= 2) else 128
    # Scoped-VMEM limit: half the physical capacity (64 MiB on v5e/v6e,
    # 32 MiB on v7x); our working set (~4 (TR,TC) f32 temporaries plus
    # double-buffered input blocks) is far below either.
    vmem_limit = int(min(vmem_cap, 128 << 20) // 2)
    return tr, tc, npad, vmem_limit


# ------------------------------ Pallas kernel ------------------------------ #

def _disco_accum_kernel(cols_ref, rows_ref, out_ref, *, n_valid):
    """One (TR, TC) tile of the centered distance matrices A, B, rebuilt from
    the 1-D vectors; the three weighted sums  sum_i nw_i * sum_j A*B / A*A /
    B*B  are accumulated into the lane-dense (8,128) output block (sublanes
    0/1/2), which stays resident across the 'arbitrary' column axis.

      cols = (TR, 5) [o, e, r', q', nw]  (column layout, DMA'd once per row tile)
      rows = (4, TC) [o, e, r', q']      (lane layout, streamed per column tile)

    with r' = amatavg - scal_A/2 so that  -r'_i - r'_j == -avg_i - avg_j + scal.
    Padded rows contribute 0 because nw == 0 there; padded columns only exist
    in the LAST column tile and are masked there only (review item 8)."""
    j = pl.program_id(1)
    n_col_tiles = pl.num_programs(1)

    @pl.when(j == 0)
    def _():
        out_ref[...] = jnp.zeros_like(out_ref)

    o_c = cols_ref[:, 0:1]          # (TR, 1)
    e_c = cols_ref[:, 1:2]
    rp_c = cols_ref[:, 2:3]
    qp_c = cols_ref[:, 3:4]
    nw_c = cols_ref[:, 4:5]
    o_r = rows_ref[0:1, :]          # (1, TC)
    e_r = rows_ref[1:2, :]
    rp_r = rows_ref[2:3, :]
    qp_r = rows_ref[3:4, :]

    def accumulate(col_mask):
        a = jnp.abs(o_c - o_r) - rp_r - rp_c        # (TR, TC) centered A tile
        b = jnp.abs(e_c - e_r) - qp_r - qp_c        # (TR, TC) centered B tile
        if col_mask is not None:                    # only on the last col tile
            a = a * col_mask
            b = b * col_mask
        wa = nw_c * a                               # row-weighted tiles
        wb = nw_c * b
        # TODO(synk): review item 7 — these full-tile reductions could ride the
        # otherwise-idle MXU (dot with a ones/selector matrix) for ~10-15% VALU.
        ab = jnp.sum(wa * b)
        aa = jnp.sum(wa * a)
        bb = jnp.sum(wb * b)
        sub = jax.lax.broadcasted_iota(jnp.int32, out_ref.shape, 0)
        out_ref[...] += jnp.where(sub == 0, ab,
                         jnp.where(sub == 1, aa,
                          jnp.where(sub == 2, bb, 0.0)))

    @pl.when(j < n_col_tiles - 1)
    def _():
        accumulate(None)                            # interior tiles: no mask

    @pl.when(j == n_col_tiles - 1)
    def _():
        tc = rows_ref.shape[1]
        col_ids = j * tc + jax.lax.broadcasted_iota(jnp.int32, (1, tc), 1)
        accumulate((col_ids < n_valid).astype(cols_ref.dtype))


# --------------------------- O(N log N) row sums ---------------------------- #

def _abs_diff_rowsums(x):
    """S[i] = sum_j |x_i - x_j| via sort + prefix sums (review item 9).
    Exact formula (ties contribute zero either way):
        S_sorted[k] = s_k * (2k - N) + total - 2 * prefix_k  (exclusive prefix)."""
    n = x.shape[0]
    order = jnp.argsort(x)
    s = x[order]
    csum = jnp.cumsum(s)
    total = csum[-1]
    prefix = csum - s
    k = jnp.arange(n, dtype=x.dtype)
    row = s * (2.0 * k - n) + total - 2.0 * prefix
    return jnp.zeros_like(x).at[order].set(row)


# --------------------------------- wrapper ---------------------------------- #

@functools.partial(jax.jit, static_argnames=("weighted",))
def bce_decorrelated_loss(outputs, labels, event, weights, *, lam=0.1, weighted=True):
    """Pallas implementation of BCEDecorrelatedLoss.forward.

    outputs: (N, 1) or (N,) logits;  labels: (N, 1) or (N,) targets in [0, 1]
    event  : (N,) variable to decorrelate against;  weights: (N, 1) per-event weights
    """
    f32 = jnp.float32
    weights_2d = (weights.ndim == 2) or (not weighted)   # torch builds ones((N,1))
    if outputs.ndim == 2 and outputs.shape[1] == 1:
        outputs = outputs[:, 0]
    if labels.ndim == 2 and labels.shape[1] == 1:
        labels = labels[:, 0]
    n = outputs.shape[0]
    nf = f32(n)
    o = outputs.astype(f32).reshape(-1)
    y = labels.astype(f32).reshape(-1)
    e = event.astype(f32).reshape(-1)
    w = weights.astype(f32).reshape(-1) if weighted else jnp.ones((n,), f32)

    # ---- O(N) part in plain JAX: BCE-with-logits + centering vectors -------- #
    bce = jnp.maximum(o, 0.0) - o * y + jnp.log1p(jnp.exp(-jnp.abs(o)))
    if weights_2d:
        # torch quirk: bce (N,) * weights (N,1) -> outer product; mean factorises.
        bce_mean = jnp.mean(bce) * jnp.mean(w)
    else:
        bce_mean = jnp.mean(bce * w)

    nw = w * nf / jnp.sum(w)                    # normedweight (sums to ~N)
    sum_nw = jnp.sum(nw)
    s_a = _abs_diff_rowsums(o)                  # sum_j |o_i - o_j|   (O(N log N))
    s_b = _abs_diff_rowsums(e)
    # TODO(synk): disco uses the module's (N,1) 'normedweight' broadcasting
    # (row scaling); a genuinely 1-D weighted distance corr would differ.
    r = nw * s_a / nf                           # amatavg[i]
    q = nw * s_b / nf                           # bmatavg[i]
    scal_a = sum_nw * jnp.sum(r) / (nf * nf)    # mean of the (N,N) outer product
    scal_b = sum_nw * jnp.sum(q) / (nf * nf)
    rp = r - 0.5 * scal_a                       # fold '+ scal' into the two subs
    qp = q - 0.5 * scal_b

    # ---- O(N^2) part: fused weighted sums of A*B, A*A, B*B on the TPU ------- #
    tr, tc, npad, vmem_limit = _choose_tiles(n)
    pad = npad - n
    op, ep = jnp.pad(o, (0, pad)), jnp.pad(e, (0, pad))
    rpp, qpp = jnp.pad(rp, (0, pad)), jnp.pad(qp, (0, pad))
    nwp = jnp.pad(nw, (0, pad))                 # zero weight on padded rows

    cols = jnp.stack([op, ep, rpp, qpp, nwp], axis=1)   # (Npad, 5) column layout
    rows = jnp.stack([op, ep, rpp, qpp], axis=0)        # (4, Npad) lane layout

    n_row_tiles, n_col_tiles = npad // tr, npad // tc
    out = pl.pallas_call(
        functools.partial(_disco_accum_kernel, n_valid=n),
        out_shape=jax.ShapeDtypeStruct((n_row_tiles * 8, 128), f32),
        grid=(n_row_tiles, n_col_tiles),
        in_specs=[
            # Column-layout block: index depends only on i -> one contiguous
            # (TR,5) DMA per ROW tile, not per grid step (review item 6 noted).
            pl.BlockSpec((tr, 5), lambda i, j: (i, 0)),
            # Lane-layout operand streams one TC-wide slab per column tile.
            pl.BlockSpec((4, tc), lambda i, j: (0, j)),
        ],
        out_specs=pl.BlockSpec((8, 128), lambda i, j: (i, 0)),
        compiler_params=pltpu.CompilerParams(
            dimension_semantics=("parallel", "arbitrary"),
            vmem_limit_bytes=vmem_limit),
    )(cols, rows)

    parts = out.reshape(n_row_tiles, 8, 128)[:, :3, 0]   # (T, 3): [ab, aa, bb]
    sums = jnp.sum(parts, axis=0)
    scale = sum_nw / (nf * nf * nf)
    ab, aa, bb = scale * sums[0], scale * sums[1], scale * sums[2]
    disco = ab / jnp.sqrt(aa * bb)              # power == 1 branch (module default)

    return {"bce": bce_mean, "disco": disco, "tot": bce_mean + lam * disco}


# --------------------------- pure-JAX reference ----------------------------- #

def _distance_corr_ref(var_1, var_2, normedweight):
    amat = jnp.abs(var_1.reshape(-1, 1) - var_1.reshape(1, -1))
    bmat = jnp.abs(var_2.reshape(-1, 1) - var_2.reshape(1, -1))
    amatavg = jnp.mean(amat * normedweight, axis=1)
    Amat = (amat - amatavg.reshape(1, -1) - amatavg.reshape(-1, 1)
            + jnp.mean(amatavg * normedweight))
    bmatavg = jnp.mean(bmat * normedweight, axis=1)
    Bmat = (bmat - bmatavg.reshape(1, -1) - bmatavg.reshape(-1, 1)
            + jnp.mean(bmatavg * normedweight))
    ABavg = jnp.mean(Amat * Bmat * normedweight, axis=1)
    AAavg = jnp.mean(Amat * Amat * normedweight, axis=1)
    BBavg = jnp.mean(Bmat * Bmat * normedweight, axis=1)
    return jnp.mean(ABavg * normedweight) / jnp.sqrt(
        jnp.mean(AAavg * normedweight) * jnp.mean(BBavg * normedweight))


def _ref_forward(outputs, labels, event, weights, lam=0.1):
    if outputs.ndim == 2 and outputs.shape[1] == 1:
        outputs = outputs[:, 0]
    if labels.ndim == 2 and labels.shape[1] == 1:
        labels = labels[:, 0]
    x, y = outputs, labels
    bce = jnp.maximum(x, 0.0) - x * y + jnp.log1p(jnp.exp(-jnp.abs(x)))
    bce_val = bce * weights                    # (N,) * (N,1) -> (N,N), as in torch
    nw = weights * weights.shape[0] / jnp.sum(weights)
    disco = _distance_corr_ref(outputs, event, nw)
    return {"bce": jnp.mean(bce_val), "disco": disco,
            "tot": jnp.mean(bce_val) + lam * disco}


# ----------------------------------- main ----------------------------------- #

if __name__ == "__main__":
    N = 300       # exercises multi-row/col tiles, interior unmasked tiles,
                  # the masked last column tile, and zero-weight padded rows
    lam = 0.1
    key = jax.random.PRNGKey(0)
    k1, k2, k3, k4 = jax.random.split(key, 4)

    outputs = jax.random.normal(k1, (N, 1), jnp.float32)               # logits
    labels = jax.random.bernoulli(k2, 0.5, (N, 1)).astype(jnp.float32)
    event = jax.random.normal(k3, (N,), jnp.float32) * 2.0 + 5.0        # e.g. mass
    weights = jax.random.uniform(k4, (N, 1), jnp.float32, 0.5, 1.5)     # per-event

    out = bce_decorrelated_loss(outputs, labels, event, weights, lam=lam, weighted=True)
    out = jax.tree_util.tree_map(jax.block_until_ready, out)

    ref = _ref_forward(outputs, labels, event, weights, lam=lam)
    for kname in ("bce", "disco", "tot"):
        np.testing.assert_allclose(np.asarray(out[kname]), np.asarray(ref[kname]),
                                   rtol=3e-4, atol=1e-5)

    print("KERNEL_OK")
</pallas_src>

<mosaic_0001>
module attributes {stable_mosaic.version = 11 : i64} {
  func.func @_disco_accum_kernel(%arg0: i32, %arg1: i32, %arg2: memref<128x5xf32, #tpu.memory_space<vmem>>, %arg3: memref<4x128xf32, #tpu.memory_space<vmem>>, %arg4: memref<8x128xf32, #tpu.memory_space<vmem>>) attributes {dimension_semantics = [#tpu.dimension_semantics<parallel>, #tpu.dimension_semantics<arbitrary>], iteration_bounds = array<i64: 3, 3>, scalar_prefetch = 0 : i64, scratch_operands = 0 : i64, tpu.core_type = #tpu.core_type<tc>, window_params = [{transform_indices = @transform_0, window_bounds = array<i64: 128, 5>}, {transform_indices = @transform_1, window_bounds = array<i64: 4, 128>}, {transform_indices = @transform_2, window_bounds = array<i64: 8, 128>}]} {
    %c0_i32 = arith.constant 0 : i32
    %0 = arith.cmpi eq, %arg1, %c0_i32 : i32
    %1 = arith.extui %0 : i1 to i32
    %c0_i32_0 = arith.constant 0 : i32
    %2 = arith.cmpi ne, %1, %c0_i32_0 : i32
    scf.if %2 {
      %cst = arith.constant 0.000000e+00 : f32
      %18 = vector.broadcast %cst : f32 to vector<8x128xf32>
      %c0_17 = arith.constant 0 : index
      %c0_18 = arith.constant 0 : index
      %19 = vector.load %arg4[%c0_17, %c0_18] : memref<8x128xf32, #tpu.memory_space<vmem>>, vector<8x128xf32>
      tpu.vector_store %arg4[%c0_17, %c0_18], %18 {strides = array<i32>} : memref<8x128xf32, #tpu.memory_space<vmem>>, vector<8x128xf32>,
    } else {
    }
    %c0 = arith.constant 0 : index
    %c0_1 = arith.constant 0 : index
    %3 = vector.load %arg2[%c0, %c0_1] : memref<128x5xf32, #tpu.memory_space<vmem>>, vector<128x1xf32>
    %c0_2 = arith.constant 0 : index
    %c1 = arith.constant 1 : index
    %4 = vector.load %arg2[%c0_2, %c1] : memref<128x5xf32, #tpu.memory_space<vmem>>, vector<128x1xf32>
    %c0_3 = arith.constant 0 : index
    %c2 = arith.constant 2 : index
    %5 = vector.load %arg2[%c0_3, %c2] : memref<128x5xf32, #tpu.memory_space<vmem>>, vector<128x1xf32>
    %c0_4 = arith.constant 0 : index
    %c3 = arith.constant 3 : index
    %6 = vector.load %arg2[%c0_4, %c3] : memref<128x5xf32, #tpu.memory_space<vmem>>, vector<128x1xf32>
    %c0_5 = arith.constant 0 : index
    %c4 = arith.constant 4 : index
    %7 = vector.load %arg2[%c0_5, %c4] : memref<128x5xf32, #tpu.memory_space<vmem>>, vector<128x1xf32>
    %c0_6 = arith.constant 0 : index
    %c0_7 = arith.constant 0 : index
    %8 = vector.load %arg3[%c0_6, %c0_7] : memref<4x128xf32, #tpu.memory_space<vmem>>, vector<1x128xf32>
    %c1_8 = arith.constant 1 : index
    %c0_9 = arith.constant 0 : index
    %9 = vector.load %arg3[%c1_8, %c0_9] : memref<4x128xf32, #tpu.memory_space<vmem>>, vector<1x128xf32>
    %c2_10 = arith.constant 2 : index
    %c0_11 = arith.constant 0 : index
    %10 = vector.load %arg3[%c2_10, %c0_11] : memref<4x128xf32, #tpu.memory_space<vmem>>, vector<1x128xf32>
    %c3_12 = arith.constant 3 : index
    %c0_13 = arith.constant 0 : index
    %11 = vector.load %arg3[%c3_12, %c0_13] : memref<4x128xf32, #tpu.memory_space<vmem>>, vector<1x128xf32>
    %c2_i32 = arith.constant 2 : i32
    %12 = arith.cmpi slt, %arg1, %c2_i32 : i32
    %13 = arith.extui %12 : i1 to i32
    %c0_i32_14 = arith.constant 0 : i32
    %14 = arith.cmpi ne, %13, %c0_i32_14 : i32
    scf.if %14 {
      %18 = vector.broadcast %3 : vector<128x1xf32> to vector<128x128xf32>
      %19 = vector.broadcast %8 : vector<1x128xf32> to vector<128x128xf32>
      %20 = arith.subf %18, %19 : vector<128x128xf32>
      %21 = math.absf %20 : vector<128x128xf32>
      %22 = vector.broadcast %10 : vector<1x128xf32> to vector<128x128xf32>
      %23 = arith.subf %21, %22 : vector<128x128xf32>
      %24 = vector.broadcast %5 : vector<128x1xf32> to vector<128x128xf32>
      %25 = arith.subf %23, %24 : vector<128x128xf32>
      %26 = vector.broadcast %4 : vector<128x1xf32> to vector<128x128xf32>
      %27 = vector.broadcast %9 : vector<1x128xf32> to vector<128x128xf32>
      %28 = arith.subf %26, %27 : vector<128x128xf32>
      %29 = math.absf %28 : vector<128x128xf32>
      %30 = vector.broadcast %11 : vector<1x128xf32> to vector<128x128xf32>
      %31 = arith.subf %29, %30 : vector<128x128xf32>
      %32 = vector.broadcast %6 : vector<128x1xf32> to vector<128x128xf32>
      %33 = arith.subf %31, %32 : vector<128x128xf32>
      %34 = vector.broadcast %7 : vector<128x1xf32> to vector<128x128xf32>
      %35 = arith.mulf %34, %25 : vector<128x128xf32>
      %36 = vector.broadcast %7 : vector<128x1xf32> to vector<128x128xf32>
      %37 = arith.mulf %36, %33 : vector<128x128xf32>
      %38 = arith.mulf %35, %33 : vector<128x128xf32>
      %39 = vector.shape_cast %38 : vector<128x128xf32> to vector<1x128x128xf32>
      %cst = arith.constant dense<0.000000e+00> : vector<1xf32>
      %40 = vector.multi_reduction <add>, %39, %cst [1, 2] : vector<1x128x128xf32> to vector<1xf32>
      %41 = vector.shape_cast %40 : vector<1xf32> to vector<1x1x1xf32>
      %42 = vector.extract %41[0, 0, 0] : f32 from vector<1x1x1xf32>
      %43 = arith.mulf %35, %25 : vector<128x128xf32>
      %44 = vector.shape_cast %43 : vector<128x128xf32> to vector<1x128x128xf32>
      %cst_17 = arith.constant dense<0.000000e+00> : vector<1xf32>
      %45 = vector.multi_reduction <add>, %44, %cst_17 [1, 2] : vector<1x128x128xf32> to vector<1xf32>
      %46 = vector.shape_cast %45 : vector<1xf32> to vector<1x1x1xf32>
      %47 = vector.extract %46[0, 0, 0] : f32 from vector<1x1x1xf32>
      %48 = arith.mulf %37, %33 : vector<128x128xf32>
      %49 = vector.shape_cast %48 : vector<128x128xf32> to vector<1x128x128xf32>
      %cst_18 = arith.constant dense<0.000000e+00> : vector<1xf32>
      %50 = vector.multi_reduction <add>, %49, %cst_18 [1, 2] : vector<1x128x128xf32> to vector<1xf32>
      %51 = vector.shape_cast %50 : vector<1xf32> to vector<1x1x1xf32>
      %52 = vector.extract %51[0, 0, 0] : f32 from vector<1x1x1xf32>
      %53 = tpu.iota {dimensions = array<i32: 0>} : vector<8x128xi32>
      %c0_19 = arith.constant 0 : index
      %c0_20 = arith.constant 0 : index
      %54 = vector.load %arg4[%c0_19, %c0_20] : memref<8x128xf32, #tpu.memory_space<vmem>>, vector<8x128xf32>
      %c0_i32_21 = arith.constant 0 : i32
      %55 = vector.broadcast %c0_i32_21 : i32 to vector<8x128xi32>
      %56 = arith.cmpi eq, %53, %55 : vector<8x128xi32>
      %c1_i32 = arith.constant 1 : i32
      %57 = vector.broadcast %c1_i32 : i32 to vector<8x128xi32>
      %58 = arith.cmpi eq, %53, %57 : vector<8x128xi32>
      %c2_i32_22 = arith.constant 2 : i32
      %59 = vector.broadcast %c2_i32_22 : i32 to vector<8x128xi32>
      %60 = arith.cmpi eq, %53, %59 : vector<8x128xi32>
      %cst_23 = arith.constant 0.000000e+00 : f32
      %61 = vector.broadcast %52 : f32 to vector<8x128xf32>
      %62 = vector.broadcast %cst_23 : f32 to vector<8x128xf32>
      %63 = arith.select %60, %61, %62 : vector<8x128xi1>, vector<8x128xf32>
      %64 = vector.broadcast %47 : f32 to vector<8x128xf32>
      %65 = arith.select %58, %64, %63 : vector<8x128xi1>, vector<8x128xf32>
      %66 = vector.broadcast %42 : f32 to vector<8x128xf32>
      %67 = arith.select %56, %66, %65 : vector<8x128xi1>, vector<8x128xf32>
      %68 = arith.addf %54, %67 : vector<8x128xf32>
      %c0_24 = arith.constant 0 : index
      %c0_25 = arith.constant 0 : index
      %69 = vector.load %arg4[%c0_24, %c0_25] : memref<8x128xf32, #tpu.memory_space<vmem>>, vector<8x128xf32>
      tpu.vector_store %arg4[%c0_24, %c0_25], %68 {strides = array<i32>} : memref<8x128xf32, #tpu.memory_space<vmem>>, vector<8x128xf32>,
    } else {
    }
    %c2_i32_15 = arith.constant 2 : i32
    %15 = arith.cmpi eq, %arg1, %c2_i32_15 : i32
    %16 = arith.extui %15 : i1 to i32
    %c0_i32_16 = arith.constant 0 : i32
    %17 = arith.cmpi ne, %16, %c0_i32_16 : i32
    scf.if %17 {
      %c128_i32 = arith.constant 128 : i32
      %18 = arith.muli %arg1, %c128_i32 : i32
      %19 = tpu.iota {dimensions = array<i32: 1>} : vector<1x128xi32>
      %20 = vector.broadcast %18 : i32 to vector<1x128xi32>
      %21 = arith.addi %20, %19 : vector<1x128xi32>
      %c300_i32 = arith.constant 300 : i32
      %22 = vector.broadcast %c300_i32 : i32 to vector<1x128xi32>
      %23 = arith.cmpi slt, %21, %22 : vector<1x128xi32>
      %24 = arith.extui %23 : vector<1x128xi1> to vector<1x128xi32>
      %25 = arith.sitofp %24 : vector<1x128xi32> to vector<1x128xf32>
      %26 = vector.broadcast %3 : vector<128x1xf32> to vector<128x128xf32>
      %27 = vector.broadcast %8 : vector<1x128xf32> to vector<128x128xf32>
      %28 = arith.subf %26, %27 : vector<128x128xf32>
      %29 = math.absf %28 : vector<128x128xf32>
      %30 = vector.broadcast %10 : vector<1x128xf32> to vector<128x128xf32>
      %31 = arith.subf %29, %30 : vector<128x128xf32>
      %32 = vector.broadcast %5 : vector<128x1xf32> to vector<128x128xf32>
      %33 = arith.subf %31, %32 : vector<128x128xf32>
      %34 = vector.broadcast %4 : vector<128x1xf32> to vector<128x128xf32>
      %35 = vector.broadcast %9 : vector<1x128xf32> to vector<128x128xf32>
      %36 = arith.subf %34, %35 : vector<128x128xf32>
      %37 = math.absf %36 : vector<128x128xf32>
      %38 = vector.broadcast %11 : vector<1x128xf32> to vector<128x128xf32>
      %39 = arith.subf %37, %38 : vector<128x128xf32>
      %40 = vector.broadcast %6 : vector<128x1xf32> to vector<128x128xf32>
      %41 = arith.subf %39, %40 : vector<128x128xf32>
      %42 = vector.broadcast %25 : vector<1x128xf32> to vector<128x128xf32>
      %43 = arith.mulf %33, %42 : vector<128x128xf32>
      %44 = vector.broadcast %25 : vector<1x128xf32> to vector<128x128xf32>
      %45 = arith.mulf %41, %44 : vector<128x128xf32>
      %46 = vector.broadcast %7 : vector<128x1xf32> to vector<128x128xf32>
      %47 = arith.mulf %46, %43 : vector<128x128xf32>
      %48 = vector.broadcast %7 : vector<128x1xf32> to vector<128x128xf32>
      %49 = arith.mulf %48, %45 : vector<128x128xf32>
      %50 = arith.mulf %47, %45 : vector<128x128xf32>
      %51 = vector.shape_cast %50 : vector<128x128xf32> to vector<1x128x128xf32>
      %cst = arith.constant dense<0.000000e+00> : vector<1xf32>
      %52 = vector.multi_reduction <add>, %51, %cst [1, 2] : vector<1x128x128xf32> to vector<1xf32>
      %53 = vector.shape_cast %52 : vector<1xf32> to vector<1x1x1xf32>
      %54 = vector.extract %53[0, 0, 0] : f32 from vector<1x1x1xf32>
      %55 = arith.mulf %47, %43 : vector<128x128xf32>
      %56 = vector.shape_cast %55 : vector<128x128xf32> to vector<1x128x128xf32>
      %cst_17 = arith.constant dense<0.000000e+00> : vector<1xf32>
      %57 = vector.multi_reduction <add>, %56, %cst_17 [1, 2] : vector<1x128x128xf32> to vector<1xf32>
      %58 = vector.shape_cast %57 : vector<1xf32> to vector<1x1x1xf32>
      %59 = vector.extract %58[0, 0, 0] : f32 from vector<1x1x1xf32>
      %60 = arith.mulf %49, %45 : vector<128x128xf32>
      %61 = vector.shape_cast %60 : vector<128x128xf32> to vector<1x128x128xf32>
      %cst_18 = arith.constant dense<0.000000e+00> : vector<1xf32>
      %62 = vector.multi_reduction <add>, %61, %cst_18 [1, 2] : vector<1x128x128xf32> to vector<1xf32>
      %63 = vector.shape_cast %62 : vector<1xf32> to vector<1x1x1xf32>
      %64 = vector.extract %63[0, 0, 0] : f32 from vector<1x1x1xf32>
      %65 = tpu.iota {dimensions = array<i32: 0>} : vector<8x128xi32>
      %c0_19 = arith.constant 0 : index
      %c0_20 = arith.constant 0 : index
      %66 = vector.load %arg4[%c0_19, %c0_20] : memref<8x128xf32, #tpu.memory_space<vmem>>, vector<8x128xf32>
      %c0_i32_21 = arith.constant 0 : i32
      %67 = vector.broadcast %c0_i32_21 : i32 to vector<8x128xi32>
      %68 = arith.cmpi eq, %65, %67 : vector<8x128xi32>
      %c1_i32 = arith.constant 1 : i32
      %69 = vector.broadcast %c1_i32 : i32 to vector<8x128xi32>
      %70 = arith.cmpi eq, %65, %69 : vector<8x128xi32>
      %c2_i32_22 = arith.constant 2 : i32
      %71 = vector.broadcast %c2_i32_22 : i32 to vector<8x128xi32>
      %72 = arith.cmpi eq, %65, %71 : vector<8x128xi32>
      %cst_23 = arith.constant 0.000000e+00 : f32
      %73 = vector.broadcast %64 : f32 to vector<8x128xf32>
      %74 = vector.broadcast %cst_23 : f32 to vector<8x128xf32>
      %75 = arith.select %72, %73, %74 : vector<8x128xi1>, vector<8x128xf32>
      %76 = vector.broadcast %59 : f32 to vector<8x128xf32>
      %77 = arith.select %70, %76, %75 : vector<8x128xi1>, vector<8x128xf32>
      %78 = vector.broadcast %54 : f32 to vector<8x128xf32>
      %79 = arith.select %68, %78, %77 : vector<8x128xi1>, vector<8x128xf32>
      %80 = arith.addf %66, %79 : vector<8x128xf32>
      %c0_24 = arith.constant 0 : index
      %c0_25 = arith.constant 0 : index
      %81 = vector.load %arg4[%c0_24, %c0_25] : memref<8x128xf32, #tpu.memory_space<vmem>>, vector<8x128xf32>
      tpu.vector_store %arg4[%c0_24, %c0_25], %80 {strides = array<i32>} : memref<8x128xf32, #tpu.memory_space<vmem>>, vector<8x128xf32>,
    } else {
    }
    return
  }
  func.func @transform_0(%arg0: i32, %arg1: i32) -> (i32, i32) {
    %c0_i32 = arith.constant 0 : i32
    %c0_i32_0 = arith.constant 0 : i32
    return %arg0, %c0_i32 : i32, i32
  }
  func.func @transform_1(%arg0: i32, %arg1: i32) -> (i32, i32) {
    %c0_i32 = arith.constant 0 : i32
    %c0_i32_0 = arith.constant 0 : i32
    return %c0_i32, %arg1 : i32, i32
  }
  func.func @transform_2(%arg0: i32, %arg1: i32) -> (i32, i32) {
    %c0_i32 = arith.constant 0 : i32
    %c0_i32_0 = arith.constant 0 : i32
    return %arg0, %c0_i32 : i32, i32
  }
}

</mosaic_0001>

<llo_original>
// kernel: bce_decorrelated_loss.1
$region0: #{bce_decorrelated_loss.1}
  #allocation0 [shape = 'u32[]', space=smem, size = 0x4, offset = 0x4, fixed_abs, tag = 'smem constant byte address 0x4 - core index']
  #allocation1 [shape = 'u32[144,128]{1,0:T(1,128)}', space=vmem, size = 0x12000, scoped, tag = 'internal scratch']
  %s0 = inlined_call_operand.vmem [shape: f32[384,5], index: 0, kind: input, shape index: {}]
  %s1 = inlined_call_operand.vmem [shape: f32[4,384], index: 1, kind: input, shape index: {}]
  %s2 = inlined_call_operand.vmem [shape: f32[24,128], index: 2, kind: output, shape index: {}]
  %s3 = sld [smem:[#allocation0]]
  $region53: #{bce_decorrelated_loss.1} parent=0
    _
  %s5 = ssub.s32 1, %s3
  %s6 = scalar_select 0, %s5, %s3
  loop: start=0, step=1, limit=11
  $region2: #{bce_decorrelated_loss.1} parent=0 // loop_pre_header
    _
  $region3: #{bce_decorrelated_loss.1} parent=0 // loop_header
    %s8 = sphi 0, %s12
    %p9 = scmp.ge.s32.totalorder %s8, 11
    %s15 = sphi 0, %s27
    %s16 = sphi 0, %s23
    %s17 = sphi 0, %s15
    %s18 = sphi 0, %s16
    %s19 = sphi 0, %s17
    %s20 = sphi 0, %s18
    %s30 = sphi 0, %s32
    %s33 = sphi 0, %s30
    %s34 = sphi 0, %s33
    %s50 = sphi 0, %s34
    %s56 = sphi 0, %s58
    %s59 = sphi 0, %s56
    %s60 = sphi 0, %s59
    %s76 = sphi 0, %s60
    %s82 = sphi 0, %s84
    %s85 = sphi 0, %s82
    %s86 = sphi 0, %s85
    %s102 = sphi 0, %s86
  $region4: #{bce_decorrelated_loss.1} parent=0 // loop_header_branch
    %11 = sbr.rel (%p9) target = $region8
  $region5: #{bce_decorrelated_loss.1} parent=0 // loop_body
    %s13 = ssub.s32 %s8, 1
    %s14 = ssub.s32 %s8, 2
    %s21 = sadd.s32 1, %s16
    %p22 = scmp.ge.s32.totalorder %s21, 3
    %s23 = scalar_select %p22, 0, %s21
    %s24 = sadd.s32 1, %s15
    %s25 = scalar_select %p22, %s24, %s15
    %p26 = scmp.ge.s32.totalorder %s25, 3
    %s27 = scalar_select %p26, 0, %s25
    %s28 = ssub.s32 %s15, %s27
    %p29 = scmp.eq.s32.totalorder %s28, 0
    %s31 = sadd.s32 %s30, 1
    %s32 = scalar_select %p29, %s30, %s31
    %p35 = pneg %p29
    %p36 = scmp.eq.s32.totalorder %s8, 8
    %p37 = por %p35, %p36
    %p38 = scmp.ne.s32.totalorder %s30, %s33
    %p39 = scmp.eq.s32.totalorder %s8, 0
    %p40 = por %p38, %p39
    %p41 = scmp.ne.s32.totalorder %s30, %s33
    %p42 = scmp.eq.s32.totalorder %s13, 8
    %p43 = por %p41, %p42
    %p44 = scmp.ne.s32.totalorder %s33, %s34
    %p45 = scmp.eq.s32.totalorder %s13, 0
    %p46 = por %p44, %p45
    %p47 = scmp.ne.s32.totalorder %s33, %s34
    %p48 = scmp.eq.s32.totalorder %s14, 8
    %p49 = por %p47, %p48
    %p51 = scmp.ne.s32.totalorder %s34, %s50
    %p52 = scmp.eq.s32.totalorder %s14, 0
    %p53 = por %p51, %p52
    %s54 = ssub.s32 %s16, %s23
    %p55 = scmp.eq.s32.totalorder %s54, 0
    %s57 = sadd.s32 %s56, 1
    %s58 = scalar_select %p55, %s56, %s57
    %p61 = pneg %p55
    %p62 = scmp.eq.s32.totalorder %s8, 8
    %p63 = por %p61, %p62
    %p64 = scmp.ne.s32.totalorder %s56, %s59
    %p65 = scmp.eq.s32.totalorder %s8, 0
    %p66 = por %p64, %p65
    %p67 = scmp.ne.s32.totalorder %s56, %s59
    %p68 = scmp.eq.s32.totalorder %s13, 8
    %p69 = por %p67, %p68
    %p70 = scmp.ne.s32.totalorder %s59, %s60
    %p71 = scmp.eq.s32.totalorder %s13, 0
    %p72 = por %p70, %p71
    %p73 = scmp.ne.s32.totalorder %s59, %s60
    %p74 = scmp.eq.s32.totalorder %s14, 8
    %p75 = por %p73, %p74
    %p77 = scmp.ne.s32.totalorder %s60, %s76
    %p78 = scmp.eq.s32.totalorder %s14, 0
    %p79 = por %p77, %p78
    %s80 = ssub.s32 %s15, %s27
    %p81 = scmp.eq.s32.totalorder %s80, 0
    %s83 = sadd.s32 %s82, 1
    %s84 = scalar_select %p81, %s82, %s83
    %p87 = pneg %p81
    %p88 = scmp.eq.s32.totalorder %s8, 8
    %p89 = por %p87, %p88
    %p90 = scmp.ne.s32.totalorder %s82, %s85
    %p91 = scmp.eq.s32.totalorder %s8, 0
    %p92 = por %p90, %p91
    %p93 = scmp.ne.s32.totalorder %s82, %s85
    %p94 = scmp.eq.s32.totalorder %s13, 8
    %p95 = por %p93, %p94
    %p96 = scmp.ne.s32.totalorder %s85, %s86
    %p97 = scmp.eq.s32.totalorder %s13, 0
    %p98 = por %p96, %p97
    %p99 = scmp.ne.s32.totalorder %s85, %s86
    %p100 = scmp.eq.s32.totalorder %s14, 8
    %p101 = por %p99, %p100
    %p103 = scmp.ne.s32.totalorder %s86, %s102
    %p104 = scmp.eq.s32.totalorder %s14, 0
    %p105 = por %p103, %p104
    %p106 = scmp.le.s32.totalorder 1, %s8
    %p107 = scmp.lt.s32.totalorder %s8, 10
    %p108 = pnand %p106, %p107
    %p109 = pneg %p108
    // Predicated region
    $region9: #{bce_decorrelated_loss.1} parent=5 // pred_check
      _
    $region10: #{bce_decorrelated_loss.1} parent=5 // pred_check_branch
      %111 = sbr.rel (%p108) target = $region12
    $region11: #{bce_decorrelated_loss.1} parent=5 // pred_region
      %s112 = ssub.s32 %s8, 1
    $region12: #{bce_decorrelated_loss.1} parent=5 // pred_fallthru
      _
    %p113 = scmp.lt.s32.totalorder %s8, 9
    // Predicated region
    $region13: #{bce_decorrelated_loss.1} parent=5 // pred_check
      %p114 = pneg %p113
    $region14: #{bce_decorrelated_loss.1} parent=5 // pred_check_branch
      %116 = sbr.rel (%p114) target = $region16
    $region15: #{bce_decorrelated_loss.1} parent=5 // pred_region
      // Predicated region
      $region17: #{bce_decorrelated_loss.1} parent=15 // pred_check
        %p117 = pneg %p40
      $region18: #{bce_decorrelated_loss.1} parent=15 // pred_check_branch
        %119 = sbr.rel (%p117) target = $region20
      $region19: #{bce_decorrelated_loss.1} parent=15 // pred_region
        %s120 = smul.u32 16, %s15
        %p121 = scmp.lt.s32.totalorder %s120, 47
        %s122 = scalar_select %p121, %s120, 47
        %s123 = smul.addr %s122, 8
        %s124 = scalar_lea.vmem %s0, %s123
        %s125 = smul.u32 16, %s15
      $region20: #{bce_decorrelated_loss.1} parent=15 // pred_fallthru
        _
      // Predicated region
      $region21: #{bce_decorrelated_loss.1} parent=15 // pred_check
        %p126 = pneg %p66
      $region22: #{bce_decorrelated_loss.1} parent=15 // pred_check_branch
        %128 = sbr.rel (%p126) target = $region24
      $region23: #{bce_decorrelated_loss.1} parent=15 // pred_region
        %p129 = scmp.lt.s32.totalorder %s16, 2
        %s130 = scalar_select %p129, %s16, 2
        %s131 = smul.addr %s130, 4
        %s132 = scalar_lea.vmem %s1, %s131
      $region24: #{bce_decorrelated_loss.1} parent=15 // pred_fallthru
        _
    $region16: #{bce_decorrelated_loss.1} parent=5 // pred_fallthru
      _
    %p133 = scmp.le.s32.totalorder 1, %s8
    %p134 = scmp.lt.s32.totalorder %s8, 10
    %p135 = pnand %p133, %p134
    %p136 = pneg %p135
    // Predicated region
    $region25: #{bce_decorrelated_loss.1} parent=5 // pred_check
      _
    $region26: #{bce_decorrelated_loss.1} parent=5 // pred_check_branch
      %138 = sbr.rel (%p135) target = $region28
    $region27: #{bce_decorrelated_loss.1} parent=5 // pred_region
      %s139 = ssub.s32 %s8, 1
      %s140 = smul.u32 16, %s17
      %p141 = scmp.lt.s32.totalorder %s140, 47
      %s142 = scalar_select %p141, %s140, 47
      %s143 = smul.addr %s142, 8
      %s144 = scalar_lea.vmem %s0, %s143
      %p145 = pneg %p46
      %p146 = pneg %p43
      %p147 = scmp.lt.s32.totalorder %s18, 2
      %s148 = scalar_select %p147, %s18, 2
      %s149 = smul.addr %s148, 4
      %s150 = scalar_lea.vmem %s1, %s149
      %p151 = pneg %p72
      %p152 = pneg %p69
      %p153 = pneg %p98
      %p154 = pneg %p95
      %p155 = scmp.lt.s32.totalorder %s17, 2
      %s156 = scalar_select %p155, %s17, 2
      %s157 = smul.addr %s156, 8
      %s158 = scalar_lea.vmem %s2, %s157
      %s159 = smul.u32 16, %s17
      %p160 = scmp.lt.s32.totalorder %s159, 47
      %s161 = scalar_select %p160, %s159, 47
      %s162 = smul.addr %s161, 8
      %s163 = scalar_lea.vmem %s0, %s162
      %s164 = smul.u32 16, %s17
      %p165 = scmp.lt.s32.totalorder %s18, 2
      %s166 = scalar_select %p165, %s18, 2
      %s167 = smul.addr %s166, 4
      %s168 = scalar_lea.vmem %s1, %s167
      %p169 = scmp.lt.s32.totalorder %s17, 2
      %s170 = scalar_select %p169, %s17, 2
      %s171 = smul.addr %s170, 8
      %s172 = scalar_lea.vmem %s2, %s171
      %p173 = scmp.eq.s32.totalorder %s18, 0
      // Predicated region
      $region29: #{bce_decorrelated_loss.1} parent=27 // pred_check
        %p174 = pneg %p173
      $region30: #{bce_decorrelated_loss.1} parent=27 // pred_check_branch
        %176 = sbr.rel (%p174) target = $region32
      $region31: #{bce_decorrelated_loss.1} parent=27 // pred_region
        %177 = vst [vmem:[%s172] sm:$0xff] 0.0
      $region32: #{bce_decorrelated_loss.1} parent=27 // pred_fallthru
        _
      %v178 = vld [vmem:[%s163] sm:$0xff]
      %v179 = vld [vmem:[%s163 + $0x8] sm:$0xff]
      %v180 = vld [vmem:[%s163 + $0x10] sm:$0xff]
      %v181 = vld [vmem:[%s163 + $0x18] sm:$0xff]
      %v182 = vld [vmem:[%s163 + $0x20] sm:$0xff]
      %v183 = vld [vmem:[%s163 + $0x28] sm:$0xff]
      %v184 = vld [vmem:[%s163 + $0x30] sm:$0xff]
      %v185 = vld [vmem:[%s163 + $0x38] sm:$0xff]
      %v186 = vld [vmem:[%s163 + $0x40] sm:$0xff]
      %v187 = vld [vmem:[%s163 + $0x48] sm:$0xff]
      %v188 = vld [vmem:[%s163 + $0x50] sm:$0xff]
      %v189 = vld [vmem:[%s163 + $0x58] sm:$0xff]
      %v190 = vld [vmem:[%s163 + $0x60] sm:$0xff]
      %v191 = vld [vmem:[%s163 + $0x68] sm:$0xff]
      %v192 = vld [vmem:[%s163 + $0x70] sm:$0xff]
      %v193 = vld [vmem:[%s163 + $0x78] sm:$0xff]
      %v194 = vld [vmem:[%s168] sm:$0x1]
      %v195 = vld [vmem:[%s168 + $0x1] sm:$0x1]
      %v196 = vld [vmem:[%s168 + $0x2] sm:$0x1]
      %v197 = vld [vmem:[%s168 + $0x3] sm:$0x1]
      %p198 = scmp.lt.s32.totalorder %s18, 2
      // Predicated region
      $region33: #{bce_decorrelated_loss.1} parent=27 // pred_check
        %p199 = pneg %p198
      $region34: #{bce_decorrelated_loss.1} parent=27 // pred_check_branch
        %201 = sbr.rel (%p199) target = $region36
      $region35: #{bce_decorrelated_loss.1} parent=27 // pred_region
        %203 = vset.pattern.permute.xlu0 0
        %204 = vperm.xlu0 %203, %v178
        %v205 = vpop.permute.xlu0 %204
        %208 = vset.pattern.permute.xlu0 0
        %209 = vperm.xlu0 %208, %v179
        %v210 = vpop.permute.xlu0 %209
        %213 = vset.pattern.permute.xlu0 0
        %214 = vperm.xlu0 %213, %v180
        %v215 = vpop.permute.xlu0 %214
        %218 = vset.pattern.permute.xlu0 0
        %219 = vperm.xlu0 %218, %v181
        %v220 = vpop.permute.xlu0 %219
        %223 = vset.pattern.permute.xlu0 0
        %224 = vperm.xlu0 %223, %v182
        %v225 = vpop.permute.xlu0 %224
        %228 = vset.pattern.permute.xlu0 0
        %229 = vperm.xlu0 %228, %v183
        %v230 = vpop.permute.xlu0 %229
        %233 = vset.pattern.permute.xlu0 0
        %234 = vperm.xlu0 %233, %v184
        %v235 = vpop.permute.xlu0 %234
        %238 = vset.pattern.permute.xlu0 0
        %239 = vperm.xlu0 %238, %v185
        %v240 = vpop.permute.xlu0 %239
        %243 = vset.pattern.permute.xlu0 0
        %244 = vperm.xlu0 %243, %v186
        %v245 = vpop.permute.xlu0 %244
        %248 = vset.pattern.permute.xlu0 0
        %249 = vperm.xlu0 %248, %v187
        %v250 = vpop.permute.xlu0 %249
        %253 = vset.pattern.permute.xlu0 0
        %254 = vperm.xlu0 %253, %v188
        %v255 = vpop.permute.xlu0 %254
        %258 = vset.pattern.permute.xlu0 0
        %259 = vperm.xlu0 %258, %v189
        %v260 = vpop.permute.xlu0 %259
        %263 = vset.pattern.permute.xlu0 0
        %264 = vperm.xlu0 %263, %v190
        %v265 = vpop.permute.xlu0 %264
        %268 = vset.pattern.permute.xlu0 0
        %269 = vperm.xlu0 %268, %v191
        %v270 = vpop.permute.xlu0 %269
        %273 = vset.pattern.permute.xlu0 0
        %274 = vperm.xlu0 %273, %v192
        %v275 = vpop.permute.xlu0 %274
        %278 = vset.pattern.permute.xlu0 0
        %279 = vperm.xlu0 %278, %v193
        %v280 = vpop.permute.xlu0 %279
        %v282 = vlaneseq
        %v283 = vshrl.u32 %v282, 7
        %v284 = vsub.s32 0, %v283
        %v285 = vrot.slane %v194, %v284
        %v286 = vsub.f32 %v205, %v285
        %v287 = vsub.f32 %v210, %v285
        %v288 = vsub.f32 %v215, %v285
        %v289 = vsub.f32 %v220, %v285
        %v290 = vsub.f32 %v225, %v285
        %v291 = vsub.f32 %v230, %v285
        %v292 = vsub.f32 %v235, %v285
        %v293 = vsub.f32 %v240, %v285
        %v294 = vsub.f32 %v245, %v285
        %v295 = vsub.f32 %v250, %v285
        %v296 = vsub.f32 %v255, %v285
        %v297 = vsub.f32 %v260, %v285
        %v298 = vsub.f32 %v265, %v285
        %v299 = vsub.f32 %v270, %v285
        %v300 = vsub.f32 %v275, %v285
        %v301 = vsub.f32 %v280, %v285
        %v302 = vand.u32 2147483647, %v286
        %v303 = vand.u32 2147483647, %v287
        %v304 = vand.u32 2147483647, %v288
        %v305 = vand.u32 2147483647, %v289
        %v306 = vand.u32 2147483647, %v290
        %v307 = vand.u32 2147483647, %v291
        %v308 = vand.u32 2147483647, %v292
        %v309 = vand.u32 2147483647, %v293
        %v310 = vand.u32 2147483647, %v294
        %v311 = vand.u32 2147483647, %v295
        %v312 = vand.u32 2147483647, %v296
        %v313 = vand.u32 2147483647, %v297
        %v314 = vand.u32 2147483647, %v298
        %v315 = vand.u32 2147483647, %v299
        %v316 = vand.u32 2147483647, %v300
        %v317 = vand.u32 2147483647, %v301
        %v318 = vlaneseq
        %v319 = vshrl.u32 %v318, 7
        %v320 = vsub.s32 0, %v319
        %v321 = vrot.slane %v196, %v320
        %v322 = vsub.f32 %v302, %v321
        %v323 = vsub.f32 %v303, %v321
        %v324 = vsub.f32 %v304, %v321
        %v325 = vsub.f32 %v305, %v321
        %v326 = vsub.f32 %v306, %v321
        %v327 = vsub.f32 %v307, %v321
        %v328 = vsub.f32 %v308, %v321
        %v329 = vsub.f32 %v309, %v321
        %v330 = vsub.f32 %v310, %v321
        %v331 = vsub.f32 %v311, %v321
        %v332 = vsub.f32 %v312, %v321
        %v333 = vsub.f32 %v313, %v321
        %v334 = vsub.f32 %v314, %v321
        %v335 = vsub.f32 %v315, %v321
        %v336 = vsub.f32 %v316, %v321
        %v337 = vsub.f32 %v317, %v321
        %338 = vset.pattern.permute.xlu0 2
        %339 = vperm.xlu0 %338, %v178
        %v340 = vpop.permute.xlu0 %339
        %342 = vset.pattern.permute.xlu0 2
        %343 = vperm.xlu0 %342, %v179
        %v344 = vpop.permute.xlu0 %343
        %346 = vset.pattern.permute.xlu0 2
        %347 = vperm.xlu0 %346, %v180
        %v348 = vpop.permute.xlu0 %347
        %350 = vset.pattern.permute.xlu0 2
        %351 = vperm.xlu0 %350, %v181
        %v352 = vpop.permute.xlu0 %351
        %354 = vset.pattern.permute.xlu0 2
        %355 = vperm.xlu0 %354, %v182
        %v356 = vpop.permute.xlu0 %355
        %358 = vset.pattern.permute.xlu0 2
        %359 = vperm.xlu0 %358, %v183
        %v360 = vpop.permute.xlu0 %359
        %362 = vset.pattern.permute.xlu0 2
        %363 = vperm.xlu0 %362, %v184
        %v364 = vpop.permute.xlu0 %363
        %366 = vset.pattern.permute.xlu0 2
        %367 = vperm.xlu0 %366, %v185
        %v368 = vpop.permute.xlu0 %367
        %370 = vset.pattern.permute.xlu0 2
        %371 = vperm.xlu0 %370, %v186
        %v372 = vpop.permute.xlu0 %371
        %374 = vset.pattern.permute.xlu0 2
        %375 = vperm.xlu0 %374, %v187
        %v376 = vpop.permute.xlu0 %375
        %378 = vset.pattern.permute.xlu0 2
        %379 = vperm.xlu0 %378, %v188
        %v380 = vpop.permute.xlu0 %379
        %382 = vset.pattern.permute.xlu0 2
        %383 = vperm.xlu0 %382, %v189
        %v384 = vpop.permute.xlu0 %383
        %386 = vset.pattern.permute.xlu0 2
        %387 = vperm.xlu0 %386, %v190
        %v388 = vpop.permute.xlu0 %387
        %390 = vset.pattern.permute.xlu0 2
        %391 = vperm.xlu0 %390, %v191
        %v392 = vpop.permute.xlu0 %391
        %394 = vset.pattern.permute.xlu0 2
        %395 = vperm.xlu0 %394, %v192
        %v396 = vpop.permute.xlu0 %395
        %398 = vset.pattern.permute.xlu0 2
        %399 = vperm.xlu0 %398, %v193
        %v400 = vpop.permute.xlu0 %399
        %v402 = vsub.f32 %v322, %v340
        %v403 = vsub.f32 %v323, %v344
        %v404 = vsub.f32 %v324, %v348
        %v405 = vsub.f32 %v325, %v352
        %v406 = vsub.f32 %v326, %v356
        %v407 = vsub.f32 %v327, %v360
        %v408 = vsub.f32 %v328, %v364
        %v409 = vsub.f32 %v329, %v368
        %v410 = vsub.f32 %v330, %v372
        %v411 = vsub.f32 %v331, %v376
        %v412 = vsub.f32 %v332, %v380
        %v413 = vsub.f32 %v333, %v384
        %v414 = vsub.f32 %v334, %v388
        %v415 = vsub.f32 %v335, %v392
        %v416 = vsub.f32 %v336, %v396
        %v417 = vsub.f32 %v337, %v400
        %418 = vset.pattern.permute.xlu0 1
        %419 = vperm.xlu0 %418, %v178
        %v420 = vpop.permute.xlu0 %419
        %422 = vset.pattern.permute.xlu0 1
        %423 = vperm.xlu0 %422, %v179
        %v424 = vpop.permute.xlu0 %423
        %426 = vset.pattern.permute.xlu0 1
        %427 = vperm.xlu0 %426, %v180
        %v428 = vpop.permute.xlu0 %427
        %430 = vset.pattern.permute.xlu0 1
        %431 = vperm.xlu0 %430, %v181
        %v432 = vpop.permute.xlu0 %431
        %434 = vset.pattern.permute.xlu0 1
        %435 = vperm.xlu0 %434, %v182
        %v436 = vpop.permute.xlu0 %435
        %438 = vset.pattern.permute.xlu0 1
        %439 = vperm.xlu0 %438, %v183
        %v440 = vpop.permute.xlu0 %439
        %442 = vset.pattern.permute.xlu0 1
        %443 = vperm.xlu0 %442, %v184
        %v444 = vpop.permute.xlu0 %443
        %446 = vset.pattern.permute.xlu0 1
        %447 = vperm.xlu0 %446, %v185
        %v448 = vpop.permute.xlu0 %447
        %450 = vset.pattern.permute.xlu0 1
        %451 = vperm.xlu0 %450, %v186
        %v452 = vpop.permute.xlu0 %451
        %454 = vset.pattern.permute.xlu0 1
        %455 = vperm.xlu0 %454, %v187
        %v456 = vpop.permute.xlu0 %455
        %458 = vset.pattern.permute.xlu0 1
        %459 = vperm.xlu0 %458, %v188
        %v460 = vpop.permute.xlu0 %459
        %462 = vset.pattern.permute.xlu0 1
        %463 = vperm.xlu0 %462, %v189
        %v464 = vpop.permute.xlu0 %463
        %466 = vset.pattern.permute.xlu0 1
        %467 = vperm.xlu0 %466, %v190
        %v468 = vpop.permute.xlu0 %467
        %470 = vset.pattern.permute.xlu0 1
        %471 = vperm.xlu0 %470, %v191
        %v472 = vpop.permute.xlu0 %471
        %474 = vset.pattern.permute.xlu0 1
        %475 = vperm.xlu0 %474, %v192
        %v476 = vpop.permute.xlu0 %475
        %478 = vset.pattern.permute.xlu0 1
        %479 = vperm.xlu0 %478, %v193
        %v480 = vpop.permute.xlu0 %479
        %v482 = vlaneseq
        %v483 = vshrl.u32 %v482, 7
        %v484 = vsub.s32 0, %v483
        %v485 = vrot.slane %v195, %v484
        %v486 = vsub.f32 %v420, %v485
        %v487 = vsub.f32 %v424, %v485
        %v488 = vsub.f32 %v428, %v485
        %v489 = vsub.f32 %v432, %v485
        %v490 = vsub.f32 %v436, %v485
        %v491 = vsub.f32 %v440, %v485
        %v492 = vsub.f32 %v444, %v485
        %v493 = vsub.f32 %v448, %v485
        %v494 = vsub.f32 %v452, %v485
        %v495 = vsub.f32 %v456, %v485
        %v496 = vsub.f32 %v460, %v485
        %v497 = vsub.f32 %v464, %v485
        %v498 = vsub.f32 %v468, %v485
        %v499 = vsub.f32 %v472, %v485
        %v500 = vsub.f32 %v476, %v485
        %v501 = vsub.f32 %v480, %v485
        %v502 = vand.u32 2147483647, %v486
        %v503 = vand.u32 2147483647, %v487
        %v504 = vand.u32 2147483647, %v488
        %v505 = vand.u32 2147483647, %v489
        %v506 = vand.u32 2147483647, %v490
        %v507 = vand.u32 2147483647, %v491
        %v508 = vand.u32 2147483647, %v492
        %v509 = vand.u32 2147483647, %v493
        %v510 = vand.u32 2147483647, %v494
        %v511 = vand.u32 2147483647, %v495
        %v512 = vand.u32 2147483647, %v496
        %v513 = vand.u32 2147483647, %v497
        %v514 = vand.u32 2147483647, %v498
        %v515 = vand.u32 2147483647, %v499
        %v516 = vand.u32 2147483647, %v500
        %v517 = vand.u32 2147483647, %v501
        %v518 = vlaneseq
        %v519 = vshrl.u32 %v518, 7
        %v520 = vsub.s32 0, %v519
        %v521 = vrot.slane %v197, %v520
        %v522 = vsub.f32 %v502, %v521
        %v523 = vsub.f32 %v503, %v521
        %v524 = vsub.f32 %v504, %v521
        %v525 = vsub.f32 %v505, %v521
        %v526 = vsub.f32 %v506, %v521
        %v527 = vsub.f32 %v507, %v521
        %v528 = vsub.f32 %v508, %v521
        %v529 = vsub.f32 %v509, %v521
        %v530 = vsub.f32 %v510, %v521
        %v531 = vsub.f32 %v511, %v521
        %v532 = vsub.f32 %v512, %v521
        %v533 = vsub.f32 %v513, %v521
        %v534 = vsub.f32 %v514, %v521
        %v535 = vsub.f32 %v515, %v521
        %v536 = vsub.f32 %v516, %v521
        %v537 = vsub.f32 %v517, %v521
        %538 = vset.pattern.permute.xlu0 3
        %539 = vperm.xlu0 %538, %v178
        %v540 = vpop.permute.xlu0 %539
        %542 = vset.pattern.permute.xlu0 3
        %543 = vperm.xlu0 %542, %v179
        %v544 = vpop.permute.xlu0 %543
        %546 = vset.pattern.permute.xlu0 3
        %547 = vperm.xlu0 %546, %v180
        %v548 = vpop.permute.xlu0 %547
        %550 = vset.pattern.permute.xlu0 3
        %551 = vperm.xlu0 %550, %v181
        %v552 = vpop.permute.xlu0 %551
        %554 = vset.pattern.permute.xlu0 3
        %555 = vperm.xlu0 %554, %v182
        %v556 = vpop.permute.xlu0 %555
        %558 = vset.pattern.permute.xlu0 3
        %559 = vperm.xlu0 %558, %v183
        %v560 = vpop.permute.xlu0 %559
        %562 = vset.pattern.permute.xlu0 3
        %563 = vperm.xlu0 %562, %v184
        %v564 = vpop.permute.xlu0 %563
        %566 = vset.pattern.permute.xlu0 3
        %567 = vperm.xlu0 %566, %v185
        %v568 = vpop.permute.xlu0 %567
        %570 = vset.pattern.permute.xlu0 3
        %571 = vperm.xlu0 %570, %v186
        %v572 = vpop.permute.xlu0 %571
        %574 = vset.pattern.permute.xlu0 3
        %575 = vperm.xlu0 %574, %v187
        %v576 = vpop.permute.xlu0 %575
        %578 = vset.pattern.permute.xlu0 3
        %579 = vperm.xlu0 %578, %v188
        %v580 = vpop.permute.xlu0 %579
        %582 = vset.pattern.permute.xlu0 3
        %583 = vperm.xlu0 %582, %v189
        %v584 = vpop.permute.xlu0 %583
        %586 = vset.pattern.permute.xlu0 3
        %587 = vperm.xlu0 %586, %v190
        %v588 = vpop.permute.xlu0 %587
        %590 = vset.pattern.permute.xlu0 3
        %591 = vperm.xlu0 %590, %v191
        %v592 = vpop.permute.xlu0 %591
        %594 = vset.pattern.permute.xlu0 3
        %595 = vperm.xlu0 %594, %v192
        %v596 = vpop.permute.xlu0 %595
        %598 = vset.pattern.permute.xlu0 3
        %599 = vperm.xlu0 %598, %v193
        %v600 = vpop.permute.xlu0 %599
        %v602 = vsub.f32 %v522, %v540
        %v603 = vsub.f32 %v523, %v544
        %v604 = vsub.f32 %v524, %v548
        %v605 = vsub.f32 %v525, %v552
        %v606 = vsub.f32 %v526, %v556
        %v607 = vsub.f32 %v527, %v560
        %v608 = vsub.f32 %v528, %v564
        %v609 = vsub.f32 %v529, %v568
        %v610 = vsub.f32 %v530, %v572
        %v611 = vsub.f32 %v531, %v576
        %v612 = vsub.f32 %v532, %v580
        %v613 = vsub.f32 %v533, %v584
        %v614 = vsub.f32 %v534, %v588
        %v615 = vsub.f32 %v535, %v592
        %v616 = vsub.f32 %v536, %v596
        %v617 = vsub.f32 %v537, %v600
        %618 = vset.pattern.permute.xlu0 4
        %619 = vperm.xlu0 %618, %v178
        %v620 = vpop.permute.xlu0 %619
        %622 = vset.pattern.permute.xlu0 4
        %623 = vperm.xlu0 %622, %v179
        %v624 = vpop.permute.xlu0 %623
        %626 = vset.pattern.permute.xlu0 4
        %627 = vperm.xlu0 %626, %v180
        %v628 = vpop.permute.xlu0 %627
        %630 = vset.pattern.permute.xlu0 4
        %631 = vperm.xlu0 %630, %v181
        %v632 = vpop.permute.xlu0 %631
        %634 = vset.pattern.permute.xlu0 4
        %635 = vperm.xlu0 %634, %v182
        %v636 = vpop.permute.xlu0 %635
        %638 = vset.pattern.permute.xlu0 4
        %639 = vperm.xlu0 %638, %v183
        %v640 = vpop.permute.xlu0 %639
        %642 = vset.pattern.permute.xlu0 4
        %643 = vperm.xlu0 %642, %v184
        %v644 = vpop.permute.xlu0 %643
        %646 = vset.pattern.permute.xlu0 4
        %647 = vperm.xlu0 %646, %v185
        %v648 = vpop.permute.xlu0 %647
        %650 = vset.pattern.permute.xlu0 4
        %651 = vperm.xlu0 %650, %v186
        %v652 = vpop.permute.xlu0 %651
        %654 = vset.pattern.permute.xlu0 4
        %655 = vperm.xlu0 %654, %v187
        %v656 = vpop.permute.xlu0 %655
        %658 = vset.pattern.permute.xlu0 4
        %659 = vperm.xlu0 %658, %v188
        %v660 = vpop.permute.xlu0 %659
        %662 = vset.pattern.permute.xlu0 4
        %663 = vperm.xlu0 %662, %v189
        %v664 = vpop.permute.xlu0 %663
        %666 = vset.pattern.permute.xlu0 4
        %667 = vperm.xlu0 %666, %v190
        %v668 = vpop.permute.xlu0 %667
        %670 = vset.pattern.permute.xlu0 4
        %671 = vperm.xlu0 %670, %v191
        %v672 = vpop.permute.xlu0 %671
        %674 = vset.pattern.permute.xlu0 4
        %675 = vperm.xlu0 %674, %v192
        %v676 = vpop.permute.xlu0 %675
        %678 = vset.pattern.permute.xlu0 4
        %679 = vperm.xlu0 %678, %v193
        %v680 = vpop.permute.xlu0 %679
        %v682 = vmul.f32 %v620, %v402
        %v683 = vmul.f32 %v624, %v403
        %v684 = vmul.f32 %v628, %v404
        %v685 = vmul.f32 %v632, %v405
        %v686 = vmul.f32 %v636, %v406
        %v687 = vmul.f32 %v640, %v407
        %v688 = vmul.f32 %v644, %v408
        %v689 = vmul.f32 %v648, %v409
        %v690 = vmul.f32 %v652, %v410
        %v691 = vmul.f32 %v656, %v411
        %v692 = vmul.f32 %v660, %v412
        %v693 = vmul.f32 %v664, %v413
        %v694 = vmul.f32 %v668, %v414
        %v695 = vmul.f32 %v672, %v415
        %v696 = vmul.f32 %v676, %v416
        %v697 = vmul.f32 %v680, %v417
        %v698 = vmul.f32 %v620, %v602
        %v699 = vmul.f32 %v624, %v603
        %v700 = vmul.f32 %v628, %v604
        %v701 = vmul.f32 %v632, %v605
        %v702 = vmul.f32 %v636, %v606
        %v703 = vmul.f32 %v640, %v607
        %v704 = vmul.f32 %v644, %v608
        %v705 = vmul.f32 %v648, %v609
        %v706 = vmul.f32 %v652, %v610
        %v707 = vmul.f32 %v656, %v611
        %v708 = vmul.f32 %v660, %v612
        %v709 = vmul.f32 %v664, %v613
        %v710 = vmul.f32 %v668, %v614
        %v711 = vmul.f32 %v672, %v615
        %v712 = vmul.f32 %v676, %v616
        %v713 = vmul.f32 %v680, %v617
        %v714 = vmul.f32 %v682, %v602
        %v715 = vmul.f32 %v683, %v603
        %v716 = vmul.f32 %v684, %v604
        %v717 = vmul.f32 %v685, %v605
        %v718 = vmul.f32 %v686, %v606
        %v719 = vmul.f32 %v687, %v607
        %v720 = vmul.f32 %v688, %v608
        %v721 = vmul.f32 %v689, %v609
        %v722 = vmul.f32 %v690, %v610
        %v723 = vmul.f32 %v691, %v611
        %v724 = vmul.f32 %v692, %v612
        %v725 = vmul.f32 %v693, %v613
        %v726 = vmul.f32 %v694, %v614
        %v727 = vmul.f32 %v695, %v615
        %v728 = vmul.f32 %v696, %v616
        %v729 = vmul.f32 %v697, %v617
        %v730 = vadd.f32 %v714, %v715
        %v731 = vadd.f32 %v730, %v716
        %v732 = vadd.f32 %v731, %v717
        %v733 = vadd.f32 %v732, %v718
        %v734 = vadd.f32 %v733, %v719
        %v735 = vadd.f32 %v734, %v720
        %v736 = vadd.f32 %v735, %v721
        %v737 = vadd.f32 %v736, %v722
        %v738 = vadd.f32 %v737, %v723
        %v739 = vadd.f32 %v738, %v724
        %v740 = vadd.f32 %v739, %v725
        %v741 = vadd.f32 %v740, %v726
        %v742 = vadd.f32 %v741, %v727
        %v743 = vadd.f32 %v742, %v728
        %v744 = vadd.f32 %v743, %v729
        %745 = vadd.xlane.f32.xlu0 %v744
        %v746 = vpop.xlane.xlu0 %745
        %v747 = vrot.slane %v746, 4
        %v748 = vadd.f32 %v746, %v747
        %v749 = vrot.slane %v748, 2
        %v750 = vadd.f32 %v748, %v749
        %v751 = vrot.slane %v750, 1
        %v752 = vadd.f32 %v750, %v751
        %s753 = vtos %v752
        %v754 = vmul.f32 %v682, %v402
        %v755 = vmul.f32 %v683, %v403
        %v756 = vmul.f32 %v684, %v404
        %v757 = vmul.f32 %v685, %v405
        %v758 = vmul.f32 %v686, %v406
        %v759 = vmul.f32 %v687, %v407
        %v760 = vmul.f32 %v688, %v408
        %v761 = vmul.f32 %v689, %v409
        %v762 = vmul.f32 %v690, %v410
        %v763 = vmul.f32 %v691, %v411
        %v764 = vmul.f32 %v692, %v412
        %v765 = vmul.f32 %v693, %v413
        %v766 = vmul.f32 %v694, %v414
        %v767 = vmul.f32 %v695, %v415
        %v768 = vmul.f32 %v696, %v416
        %v769 = vmul.f32 %v697, %v417
        %v770 = vadd.f32 %v754, %v755
        %v771 = vadd.f32 %v770, %v756
        %v772 = vadd.f32 %v771, %v757
        %v773 = vadd.f32 %v772, %v758
        %v774 = vadd.f32 %v773, %v759
        %v775 = vadd.f32 %v774, %v760
        %v776 = vadd.f32 %v775, %v761
        %v777 = vadd.f32 %v776, %v762
        %v778 = vadd.f32 %v777, %v763
        %v779 = vadd.f32 %v778, %v764
        %v780 = vadd.f32 %v779, %v765
        %v781 = vadd.f32 %v780, %v766
        %v782 = vadd.f32 %v781, %v767
        %v783 = vadd.f32 %v782, %v768
        %v784 = vadd.f32 %v783, %v769
        %785 = vadd.xlane.f32.xlu0 %v784
        %v786 = vpop.xlane.xlu0 %785
        %v787 = vrot.slane %v786, 4
        %v788 = vadd.f32 %v786, %v787
        %v789 = vrot.slane %v788, 2
        %v790 = vadd.f32 %v788, %v789
        %v791 = vrot.slane %v790, 1
        %v792 = vadd.f32 %v790, %v791
        %s793 = vtos %v792
        %v794 = vmul.f32 %v698, %v602
        %v795 = vmul.f32 %v699, %v603
        %v796 = vmul.f32 %v700, %v604
        %v797 = vmul.f32 %v701, %v605
        %v798 = vmul.f32 %v702, %v606
        %v799 = vmul.f32 %v703, %v607
        %v800 = vmul.f32 %v704, %v608
        %v801 = vmul.f32 %v705, %v609
        %v802 = vmul.f32 %v706, %v610
        %v803 = vmul.f32 %v707, %v611
        %v804 = vmul.f32 %v708, %v612
        %v805 = vmul.f32 %v709, %v613
        %v806 = vmul.f32 %v710, %v614
        %v807 = vmul.f32 %v711, %v615
        %v808 = vmul.f32 %v712, %v616
        %v809 = vmul.f32 %v713, %v617
        %v810 = vadd.f32 %v794, %v795
        %v811 = vadd.f32 %v810, %v796
        %v812 = vadd.f32 %v811, %v797
        %v813 = vadd.f32 %v812, %v798
        %v814 = vadd.f32 %v813, %v799
        %v815 = vadd.f32 %v814, %v800
        %v816 = vadd.f32 %v815, %v801
        %v817 = vadd.f32 %v816, %v802
        %v818 = vadd.f32 %v817, %v803
        %v819 = vadd.f32 %v818, %v804
        %v820 = vadd.f32 %v819, %v805
        %v821 = vadd.f32 %v820, %v806
        %v822 = vadd.f32 %v821, %v807
        %v823 = vadd.f32 %v822, %v808
        %v824 = vadd.f32 %v823, %v809
        %825 = vadd.xlane.f32.xlu0 %v824
        %v826 = vpop.xlane.xlu0 %825
        %v827 = vrot.slane %v826, 4
        %v828 = vadd.f32 %v826, %v827
        %v829 = vrot.slane %v828, 2
        %v830 = vadd.f32 %v828, %v829
        %v831 = vrot.slane %v830, 1
        %v832 = vadd.f32 %v830, %v831
        %s833 = vtos %v832
        %v834 = vlaneseq
        %v835 = vshrl.u32 %v834, 7
        %v836 = vld [vmem:[%s172] sm:$0xff]
        %vm837 = vcmp.eq.s32.totalorder %v835, 0
        %vm838 = vcmp.eq.s32.totalorder %v835, 1
        %vm839 = vcmp.eq.s32.totalorder %v835, 2
        %v840 = vstv %s833
        %v841 = vsel %vm839, %v840, 0.0
        %v842 = vstv %s793
        %v843 = vsel %vm838, %v842, %v841
        %v844 = vstv %s753
        %v845 = vsel %vm837, %v844, %v843
        %v846 = vadd.f32 %v836, %v845
        %847 = vst [vmem:[%s172] sm:$0xff] %v846
      $region36: #{bce_decorrelated_loss.1} parent=27 // pred_fallthru
        _
      %p848 = scmp.eq.s32.totalorder %s18, 2
      // Predicated region
      $region37: #{bce_decorrelated_loss.1} parent=27 // pred_check
        %p849 = pneg %p848
      $region38: #{bce_decorrelated_loss.1} parent=27 // pred_check_branch
        %851 = sbr.rel (%p849) target = $region40
      $region39: #{bce_decorrelated_loss.1} parent=27 // pred_region
        %s852 = smul.u32 %s18, 128
        %v853 = vlaneseq
        %v854 = vand.u32 %v853, 127
        %v855 = vstv %s852
        %v856 = vadd.s32 %v855, %v854
        %vm857 = vcmp.lt.s32.totalorder %v856, 300
        %v858 = vsel %vm857, 1, 0
        %v859 = vcvt.s32.f32 %v858
        %861 = vset.pattern.permute.xlu0 0
        %862 = vperm.xlu0 %861, %v178
        %v863 = vpop.permute.xlu0 %862
        %866 = vset.pattern.permute.xlu0 0
        %867 = vperm.xlu0 %866, %v179
        %v868 = vpop.permute.xlu0 %867
        %871 = vset.pattern.permute.xlu0 0
        %872 = vperm.xlu0 %871, %v180
        %v873 = vpop.permute.xlu0 %872
        %876 = vset.pattern.permute.xlu0 0
        %877 = vperm.xlu0 %876, %v181
        %v878 = vpop.permute.xlu0 %877
        %881 = vset.pattern.permute.xlu0 0
        %882 = vperm.xlu0 %881, %v182
        %v883 = vpop.permute.xlu0 %882
        %886 = vset.pattern.permute.xlu0 0
        %887 = vperm.xlu0 %886, %v183
        %v888 = vpop.permute.xlu0 %887
        %891 = vset.pattern.permute.xlu0 0
        %892 = vperm.xlu0 %891, %v184
        %v893 = vpop.permute.xlu0 %892
        %896 = vset.pattern.permute.xlu0 0
        %897 = vperm.xlu0 %896, %v185
        %v898 = vpop.permute.xlu0 %897
        %901 = vset.pattern.permute.xlu0 0
        %902 = vperm.xlu0 %901, %v186
        %v903 = vpop.permute.xlu0 %902
        %906 = vset.pattern.permute.xlu0 0
        %907 = vperm.xlu0 %906, %v187
        %v908 = vpop.permute.xlu0 %907
        %911 = vset.pattern.permute.xlu0 0
        %912 = vperm.xlu0 %911, %v188
        %v913 = vpop.permute.xlu0 %912
        %916 = vset.pattern.permute.xlu0 0
        %917 = vperm.xlu0 %916, %v189
        %v918 = vpop.permute.xlu0 %917
        %921 = vset.pattern.permute.xlu0 0
        %922 = vperm.xlu0 %921, %v190
        %v923 = vpop.permute.xlu0 %922
        %926 = vset.pattern.permute.xlu0 0
        %927 = vperm.xlu0 %926, %v191
        %v928 = vpop.permute.xlu0 %927
        %931 = vset.pattern.permute.xlu0 0
        %932 = vperm.xlu0 %931, %v192
        %v933 = vpop.permute.xlu0 %932
        %936 = vset.pattern.permute.xlu0 0
        %937 = vperm.xlu0 %936, %v193
        %v938 = vpop.permute.xlu0 %937
        %v940 = vlaneseq
        %v941 = vshrl.u32 %v940, 7
        %v942 = vsub.s32 0, %v941
        %v943 = vrot.slane %v194, %v942
        %v944 = vsub.f32 %v863, %v943
        %v945 = vsub.f32 %v868, %v943
        %v946 = vsub.f32 %v873, %v943
        %v947 = vsub.f32 %v878, %v943
        %v948 = vsub.f32 %v883, %v943
        %v949 = vsub.f32 %v888, %v943
        %v950 = vsub.f32 %v893, %v943
        %v951 = vsub.f32 %v898, %v943
        %v952 = vsub.f32 %v903, %v943
        %v953 = vsub.f32 %v908, %v943
        %v954 = vsub.f32 %v913, %v943
        %v955 = vsub.f32 %v918, %v943
        %v956 = vsub.f32 %v923, %v943
        %v957 = vsub.f32 %v928, %v943
        %v958 = vsub.f32 %v933, %v943
        %v959 = vsub.f32 %v938, %v943
        %v960 = vand.u32 2147483647, %v944
        %v961 = vand.u32 2147483647, %v945
        %v962 = vand.u32 2147483647, %v946
        %v963 = vand.u32 2147483647, %v947
        %v964 = vand.u32 2147483647, %v948
        %v965 = vand.u32 2147483647, %v949
        %v966 = vand.u32 2147483647, %v950
        %v967 = vand.u32 2147483647, %v951
        %v968 = vand.u32 2147483647, %v952
        %v969 = vand.u32 2147483647, %v953
        %v970 = vand.u32 2147483647, %v954
        %v971 = vand.u32 2147483647, %v955
        %v972 = vand.u32 2147483647, %v956
        %v973 = vand.u32 2147483647, %v957
        %v974 = vand.u32 2147483647, %v958
        %v975 = vand.u32 2147483647, %v959
        %v976 = vlaneseq
        %v977 = vshrl.u32 %v976, 7
        %v978 = vsub.s32 0, %v977
        %v979 = vrot.slane %v196, %v978
        %v980 = vsub.f32 %v960, %v979
        %v981 = vsub.f32 %v961, %v979
        %v982 = vsub.f32 %v962, %v979
        %v983 = vsub.f32 %v963, %v979
        %v984 = vsub.f32 %v964, %v979
        %v985 = vsub.f32 %v965, %v979
        %v986 = vsub.f32 %v966, %v979
        %v987 = vsub.f32 %v967, %v979
        %v988 = vsub.f32 %v968, %v979
        %v989 = vsub.f32 %v969, %v979
        %v990 = vsub.f32 %v970, %v979
        %v991 = vsub.f32 %v971, %v979
        %v992 = vsub.f32 %v972, %v979
        %v993 = vsub.f32 %v973, %v979
        %v994 = vsub.f32 %v974, %v979
        %v995 = vsub.f32 %v975, %v979
        %996 = vset.pattern.permute.xlu0 2
        %997 = vperm.xlu0 %996, %v178
        %v998 = vpop.permute.xlu0 %997
        %1000 = vset.pattern.permute.xlu0 2
        %1001 = vperm.xlu0 %1000, %v179
        %v1002 = vpop.permute.xlu0 %1001
        %1004 = vset.pattern.permute.xlu0 2
        %1005 = vperm.xlu0 %1004, %v180
        %v1006 = vpop.permute.xlu0 %1005
        %1008 = vset.pattern.permute.xlu0 2
        %1009 = vperm.xlu0 %1008, %v181
        %v1010 = vpop.permute.xlu0 %1009
        %1012 = vset.pattern.permute.xlu0 2
        %1013 = vperm.xlu0 %1012, %v182
        %v1014 = vpop.permute.xlu0 %1013
        %1016 = vset.pattern.permute.xlu0 2
        %1017 = vperm.xlu0 %1016, %v183
        %v1018 = vpop.permute.xlu0 %1017
        %1020 = vset.pattern.permute.xlu0 2
        %1021 = vperm.xlu0 %1020, %v184
        %v1022 = vpop.permute.xlu0 %1021
        %1024 = vset.pattern.permute.xlu0 2
        %1025 = vperm.xlu0 %1024, %v185
        %v1026 = vpop.permute.xlu0 %1025
        %1028 = vset.pattern.permute.xlu0 2
        %1029 = vperm.xlu0 %1028, %v186
        %v1030 = vpop.permute.xlu0 %1029
        %1032 = vset.pattern.permute.xlu0 2
        %1033 = vperm.xlu0 %1032, %v187
        %v1034 = vpop.permute.xlu0 %1033
        %1036 = vset.pattern.permute.xlu0 2
        %1037 = vperm.xlu0 %1036, %v188
        %v1038 = vpop.permute.xlu0 %1037
        %1040 = vset.pattern.permute.xlu0 2
        %1041 = vperm.xlu0 %1040, %v189
        %v1042 = vpop.permute.xlu0 %1041
        %1044 = vset.pattern.permute.xlu0 2
        %1045 = vperm.xlu0 %1044, %v190
        %v1046 = vpop.permute.xlu0 %1045
        %1048 = vset.pattern.permute.xlu0 2
        %1049 = vperm.xlu0 %1048, %v191
        %v1050 = vpop.permute.xlu0 %1049
        %1052 = vset.pattern.permute.xlu0 2
        %1053 = vperm.xlu0 %1052, %v192
        %v1054 = vpop.permute.xlu0 %1053
        %1056 = vset.pattern.permute.xlu0 2
        %1057 = vperm.xlu0 %1056, %v193
        %v1058 = vpop.permute.xlu0 %1057
        %v1060 = vsub.f32 %v980, %v998
        %v1061 = vsub.f32 %v981, %v1002
        %v1062 = vsub.f32 %v982, %v1006
        %v1063 = vsub.f32 %v983, %v1010
        %v1064 = vsub.f32 %v984, %v1014
        %v1065 = vsub.f32 %v985, %v1018
        %v1066 = vsub.f32 %v986, %v1022
        %v1067 = vsub.f32 %v987, %v1026
        %v1068 = vsub.f32 %v988, %v1030
        %v1069 = vsub.f32 %v989, %v1034
        %v1070 = vsub.f32 %v990, %v1038
        %v1071 = vsub.f32 %v991, %v1042
        %v1072 = vsub.f32 %v992, %v1046
        %v1073 = vsub.f32 %v993, %v1050
        %v1074 = vsub.f32 %v994, %v1054
        %v1075 = vsub.f32 %v995, %v1058
        %1076 = vset.pattern.permute.xlu0 1
        %1077 = vperm.xlu0 %1076, %v178
        %v1078 = vpop.permute.xlu0 %1077
        %1080 = vset.pattern.permute.xlu0 1
        %1081 = vperm.xlu0 %1080, %v179
        %v1082 = vpop.permute.xlu0 %1081
        %1084 = vset.pattern.permute.xlu0 1
        %1085 = vperm.xlu0 %1084, %v180
        %v1086 = vpop.permute.xlu0 %1085
        %1088 = vset.pattern.permute.xlu0 1
        %1089 = vperm.xlu0 %1088, %v181
        %v1090 = vpop.permute.xlu0 %1089
        %1092 = vset.pattern.permute.xlu0 1
        %1093 = vperm.xlu0 %1092, %v182
        %v1094 = vpop.permute.xlu0 %1093
        %1096 = vset.pattern.permute.xlu0 1
        %1097 = vperm.xlu0 %1096, %v183
        %v1098 = vpop.permute.xlu0 %1097
        %1100 = vset.pattern.permute.xlu0 1
        %1101 = vperm.xlu0 %1100, %v184
        %v1102 = vpop.permute.xlu0 %1101
        %1104 = vset.pattern.permute.xlu0 1
        %1105 = vperm.xlu0 %1104, %v185
        %v1106 = vpop.permute.xlu0 %1105
        %1108 = vset.pattern.permute.xlu0 1
        %1109 = vperm.xlu0 %1108, %v186
        %v1110 = vpop.permute.xlu0 %1109
        %1112 = vset.pattern.permute.xlu0 1
        %1113 = vperm.xlu0 %1112, %v187
        %v1114 = vpop.permute.xlu0 %1113
        %1116 = vset.pattern.permute.xlu0 1
        %1117 = vperm.xlu0 %1116, %v188
        %v1118 = vpop.permute.xlu0 %1117
        %1120 = vset.pattern.permute.xlu0 1
        %1121 = vperm.xlu0 %1120, %v189
        %v1122 = vpop.permute.xlu0 %1121
        %1124 = vset.pattern.permute.xlu0 1
        %1125 = vperm.xlu0 %1124, %v190
        %v1126 = vpop.permute.xlu0 %1125
        %1128 = vset.pattern.permute.xlu0 1
        %1129 = vperm.xlu0 %1128, %v191
        %v1130 = vpop.permute.xlu0 %1129
        %1132 = vset.pattern.permute.xlu0 1
        %1133 = vperm.xlu0 %1132, %v192
        %v1134 = vpop.permute.xlu0 %1133
        %1136 = vset.pattern.permute.xlu0 1
        %1137 = vperm.xlu0 %1136, %v193
        %v1138 = vpop.permute.xlu0 %1137
        %v1140 = vlaneseq
        %v1141 = vshrl.u32 %v1140, 7
        %v1142 = vsub.s32 0, %v1141
        %v1143 = vrot.slane %v195, %v1142
        %v1144 = vsub.f32 %v1078, %v1143
        %v1145 = vsub.f32 %v1082, %v1143
        %v1146 = vsub.f32 %v1086, %v1143
        %v1147 = vsub.f32 %v1090, %v1143
        %v1148 = vsub.f32 %v1094, %v1143
        %v1149 = vsub.f32 %v1098, %v1143
        %v1150 = vsub.f32 %v1102, %v1143
        %v1151 = vsub.f32 %v1106, %v1143
        %v1152 = vsub.f32 %v1110, %v1143
        %v1153 = vsub.f32 %v1114, %v1143
        %v1154 = vsub.f32 %v1118, %v1143
        %v1155 = vsub.f32 %v1122, %v1143
        %v1156 = vsub.f32 %v1126, %v1143
        %v1157 = vsub.f32 %v1130, %v1143
        %v1158 = vsub.f32 %v1134, %v1143
        %v1159 = vsub.f32 %v1138, %v1143
        %v1160 = vand.u32 2147483647, %v1144
        %v1161 = vand.u32 2147483647, %v1145
        %v1162 = vand.u32 2147483647, %v1146
        %v1163 = vand.u32 2147483647, %v1147
        %v1164 = vand.u32 2147483647, %v1148
        %v1165 = vand.u32 2147483647, %v1149
        %v1166 = vand.u32 2147483647, %v1150
        %v1167 = vand.u32 2147483647, %v1151
        %v1168 = vand.u32 2147483647, %v1152
        %v1169 = vand.u32 2147483647, %v1153
        %v1170 = vand.u32 2147483647, %v1154
        %v1171 = vand.u32 2147483647, %v1155
        %v1172 = vand.u32 2147483647, %v1156
        %v1173 = vand.u32 2147483647, %v1157
        %v1174 = vand.u32 2147483647, %v1158
        %v1175 = vand.u32 2147483647, %v1159
        %v1176 = vlaneseq
        %v1177 = vshrl.u32 %v1176, 7
        %v1178 = vsub.s32 0, %v1177
        %v1179 = vrot.slane %v197, %v1178
        %v1180 = vsub.f32 %v1160, %v1179
        %v1181 = vsub.f32 %v1161, %v1179
        %v1182 = vsub.f32 %v1162, %v1179
        %v1183 = vsub.f32 %v1163, %v1179
        %v1184 = vsub.f32 %v1164, %v1179
        %v1185 = vsub.f32 %v1165, %v1179
        %v1186 = vsub.f32 %v1166, %v1179
        %v1187 = vsub.f32 %v1167, %v1179
        %v1188 = vsub.f32 %v1168, %v1179
        %v1189 = vsub.f32 %v1169, %v1179
        %v1190 = vsub.f32 %v1170, %v1179
        %v1191 = vsub.f32 %v1171, %v1179
        %v1192 = vsub.f32 %v1172, %v1179
        %v1193 = vsub.f32 %v1173, %v1179
        %v1194 = vsub.f32 %v1174, %v1179
        %v1195 = vsub.f32 %v1175, %v1179
        %1196 = vset.pattern.permute.xlu0 3
        %1197 = vperm.xlu0 %1196, %v178
        %v1198 = vpop.permute.xlu0 %1197
        %1200 = vset.pattern.permute.xlu0 3
        %1201 = vperm.xlu0 %1200, %v179
        %v1202 = vpop.permute.xlu0 %1201
        %1204 = vset.pattern.permute.xlu0 3
        %1205 = vperm.xlu0 %1204, %v180
        %v1206 = vpop.permute.xlu0 %1205
        %1208 = vset.pattern.permute.xlu0 3
        %1209 = vperm.xlu0 %1208, %v181
        %v1210 = vpop.permute.xlu0 %1209
        %1212 = vset.pattern.permute.xlu0 3
        %1213 = vperm.xlu0 %1212, %v182
        %v1214 = vpop.permute.xlu0 %1213
        %1216 = vset.pattern.permute.xlu0 3
        %1217 = vperm.xlu0 %1216, %v183
        %v1218 = vpop.permute.xlu0 %1217
        %1220 = vset.pattern.permute.xlu0 3
        %1221 = vperm.xlu0 %1220, %v184
        %v1222 = vpop.permute.xlu0 %1221
        %1224 = vset.pattern.permute.xlu0 3
        %1225 = vperm.xlu0 %1224, %v185
        %v1226 = vpop.permute.xlu0 %1225
        %1228 = vset.pattern.permute.xlu0 3
        %1229 = vperm.xlu0 %1228, %v186
        %v1230 = vpop.permute.xlu0 %1229
        %1232 = vset.pattern.permute.xlu0 3
        %1233 = vperm.xlu0 %1232, %v187
        %v1234 = vpop.permute.xlu0 %1233
        %1236 = vset.pattern.permute.xlu0 3
        %1237 = vperm.xlu0 %1236, %v188
        %v1238 = vpop.permute.xlu0 %1237
        %1240 = vset.pattern.permute.xlu0 3
        %1241 = vperm.xlu0 %1240, %v189
        %v1242 = vpop.permute.xlu0 %1241
        %1244 = vset.pattern.permute.xlu0 3
        %1245 = vperm.xlu0 %1244, %v190
        %v1246 = vpop.permute.xlu0 %1245
        %1248 = vset.pattern.permute.xlu0 3
        %1249 = vperm.xlu0 %1248, %v191
        %v1250 = vpop.permute.xlu0 %1249
        %1252 = vset.pattern.permute.xlu0 3
        %1253 = vperm.xlu0 %1252, %v192
        %v1254 = vpop.permute.xlu0 %1253
        %1256 = vset.pattern.permute.xlu0 3
        %1257 = vperm.xlu0 %1256, %v193
        %v1258 = vpop.permute.xlu0 %1257
        %v1260 = vsub.f32 %v1180, %v1198
        %v1261 = vsub.f32 %v1181, %v1202
        %v1262 = vsub.f32 %v1182, %v1206
        %v1263 = vsub.f32 %v1183, %v1210
        %v1264 = vsub.f32 %v1184, %v1214
        %v1265 = vsub.f32 %v1185, %v1218
        %v1266 = vsub.f32 %v1186, %v1222
        %v1267 = vsub.f32 %v1187, %v1226
        %v1268 = vsub.f32 %v1188, %v1230
        %v1269 = vsub.f32 %v1189, %v1234
        %v1270 = vsub.f32 %v1190, %v1238
        %v1271 = vsub.f32 %v1191, %v1242
        %v1272 = vsub.f32 %v1192, %v1246
        %v1273 = vsub.f32 %v1193, %v1250
        %v1274 = vsub.f32 %v1194, %v1254
        %v1275 = vsub.f32 %v1195, %v1258
        %v1276 = vmul.f32 %v1060, %v859
        %v1277 = vmul.f32 %v1061, %v859
        %v1278 = vmul.f32 %v1062, %v859
        %v1279 = vmul.f32 %v1063, %v859
        %v1280 = vmul.f32 %v1064, %v859
        %v1281 = vmul.f32 %v1065, %v859
        %v1282 = vmul.f32 %v1066, %v859
        %v1283 = vmul.f32 %v1067, %v859
        %v1284 = vmul.f32 %v1068, %v859
        %v1285 = vmul.f32 %v1069, %v859
        %v1286 = vmul.f32 %v1070, %v859
        %v1287 = vmul.f32 %v1071, %v859
        %v1288 = vmul.f32 %v1072, %v859
        %v1289 = vmul.f32 %v1073, %v859
        %v1290 = vmul.f32 %v1074, %v859
        %v1291 = vmul.f32 %v1075, %v859
        %v1292 = vmul.f32 %v1260, %v859
        %v1293 = vmul.f32 %v1261, %v859
        %v1294 = vmul.f32 %v1262, %v859
        %v1295 = vmul.f32 %v1263, %v859
        %v1296 = vmul.f32 %v1264, %v859
        %v1297 = vmul.f32 %v1265, %v859
        %v1298 = vmul.f32 %v1266, %v859
        %v1299 = vmul.f32 %v1267, %v859
        %v1300 = vmul.f32 %v1268, %v859
        %v1301 = vmul.f32 %v1269, %v859
        %v1302 = vmul.f32 %v1270, %v859
        %v1303 = vmul.f32 %v1271, %v859
        %v1304 = vmul.f32 %v1272, %v859
        %v1305 = vmul.f32 %v1273, %v859
        %v1306 = vmul.f32 %v1274, %v859
        %v1307 = vmul.f32 %v1275, %v859
        %1308 = vset.pattern.permute.xlu0 4
        %1309 = vperm.xlu0 %1308, %v178
        %v1310 = vpop.permute.xlu0 %1309
        %1312 = vset.pattern.permute.xlu0 4
        %1313 = vperm.xlu0 %1312, %v179
        %v1314 = vpop.permute.xlu0 %1313
        %1316 = vset.pattern.permute.xlu0 4
        %1317 = vperm.xlu0 %1316, %v180
        %v1318 = vpop.permute.xlu0 %1317
        %1320 = vset.pattern.permute.xlu0 4
        %1321 = vperm.xlu0 %1320, %v181
        %v1322 = vpop.permute.xlu0 %1321
        %1324 = vset.pattern.permute.xlu0 4
        %1325 = vperm.xlu0 %1324, %v182
        %v1326 = vpop.permute.xlu0 %1325
        %1328 = vset.pattern.permute.xlu0 4
        %1329 = vperm.xlu0 %1328, %v183
        %v1330 = vpop.permute.xlu0 %1329
        %1332 = vset.pattern.permute.xlu0 4
        %1333 = vperm.xlu0 %1332, %v184
        %v1334 = vpop.permute.xlu0 %1333
        %1336 = vset.pattern.permute.xlu0 4
        %1337 = vperm.xlu0 %1336, %v185
        %v1338 = vpop.permute.xlu0 %1337
        %1340 = vset.pattern.permute.xlu0 4
        %1341 = vperm.xlu0 %1340, %v186
        %v1342 = vpop.permute.xlu0 %1341
        %1344 = vset.pattern.permute.xlu0 4
        %1345 = vperm.xlu0 %1344, %v187
        %v1346 = vpop.permute.xlu0 %1345
        %1348 = vset.pattern.permute.xlu0 4
        %1349 = vperm.xlu0 %1348, %v188
        %v1350 = vpop.permute.xlu0 %1349
        %1352 = vset.pattern.permute.xlu0 4
        %1353 = vperm.xlu0 %1352, %v189
        %v1354 = vpop.permute.xlu0 %1353
        %1356 = vset.pattern.permute.xlu0 4
        %1357 = vperm.xlu0 %1356, %v190
        %v1358 = vpop.permute.xlu0 %1357
        %1360 = vset.pattern.permute.xlu0 4
        %1361 = vperm.xlu0 %1360, %v191
        %v1362 = vpop.permute.xlu0 %1361
        %1364 = vset.pattern.permute.xlu0 4
        %1365 = vperm.xlu0 %1364, %v192
        %v1366 = vpop.permute.xlu0 %1365
        %1368 = vset.pattern.permute.xlu0 4
        %1369 = vperm.xlu0 %1368, %v193
        %v1370 = vpop.permute.xlu0 %1369
        %v1372 = vmul.f32 %v1310, %v1276
        %v1373 = vmul.f32 %v1314, %v1277
        %v1374 = vmul.f32 %v1318, %v1278
        %v1375 = vmul.f32 %v1322, %v1279
        %v1376 = vmul.f32 %v1326, %v1280
        %v1377 = vmul.f32 %v1330, %v1281
        %v1378 = vmul.f32 %v1334, %v1282
        %v1379 = vmul.f32 %v1338, %v1283
        %v1380 = vmul.f32 %v1342, %v1284
        %v1381 = vmul.f32 %v1346, %v1285
        %v1382 = vmul.f32 %v1350, %v1286
        %v1383 = vmul.f32 %v1354, %v1287
        %v1384 = vmul.f32 %v1358, %v1288
        %v1385 = vmul.f32 %v1362, %v1289
        %v1386 = vmul.f32 %v1366, %v1290
        %v1387 = vmul.f32 %v1370, %v1291
        %v1388 = vmul.f32 %v1310, %v1292
        %v1389 = vmul.f32 %v1314, %v1293
        %v1390 = vmul.f32 %v1318, %v1294
        %v1391 = vmul.f32 %v1322, %v1295
        %v1392 = vmul.f32 %v1326, %v1296
        %v1393 = vmul.f32 %v1330, %v1297
        %v1394 = vmul.f32 %v1334, %v1298
        %v1395 = vmul.f32 %v1338, %v1299
        %v1396 = vmul.f32 %v1342, %v1300
        %v1397 = vmul.f32 %v1346, %v1301
        %v1398 = vmul.f32 %v1350, %v1302
        %v1399 = vmul.f32 %v1354, %v1303
        %v1400 = vmul.f32 %v1358, %v1304
        %v1401 = vmul.f32 %v1362, %v1305
        %v1402 = vmul.f32 %v1366, %v1306
        %v1403 = vmul.f32 %v1370, %v1307
        %v1404 = vmul.f32 %v1372, %v1292
        %v1405 = vmul.f32 %v1373, %v1293
        %v1406 = vmul.f32 %v1374, %v1294
        %v1407 = vmul.f32 %v1375, %v1295
        %v1408 = vmul.f32 %v1376, %v1296
        %v1409 = vmul.f32 %v1377, %v1297
        %v1410 = vmul.f32 %v1378, %v1298
        %v1411 = vmul.f32 %v1379, %v1299
        %v1412 = vmul.f32 %v1380, %v1300
        %v1413 = vmul.f32 %v1381, %v1301
        %v1414 = vmul.f32 %v1382, %v1302
        %v1415 = vmul.f32 %v1383, %v1303
        %v1416 = vmul.f32 %v1384, %v1304
        %v1417 = vmul.f32 %v1385, %v1305
        %v1418 = vmul.f32 %v1386, %v1306
        %v1419 = vmul.f32 %v1387, %v1307
        %v1420 = vadd.f32 %v1404, %v1405
        %v1421 = vadd.f32 %v1420, %v1406
        %v1422 = vadd.f32 %v1421, %v1407
        %v1423 = vadd.f32 %v1422, %v1408
        %v1424 = vadd.f32 %v1423, %v1409
        %v1425 = vadd.f32 %v1424, %v1410
        %v1426 = vadd.f32 %v1425, %v1411
        %v1427 = vadd.f32 %v1426, %v1412
        %v1428 = vadd.f32 %v1427, %v1413
        %v1429 = vadd.f32 %v1428, %v1414
        %v1430 = vadd.f32 %v1429, %v1415
        %v1431 = vadd.f32 %v1430, %v1416
        %v1432 = vadd.f32 %v1431, %v1417
        %v1433 = vadd.f32 %v1432, %v1418
        %v1434 = vadd.f32 %v1433, %v1419
        %1435 = vadd.xlane.f32.xlu0 %v1434
        %v1436 = vpop.xlane.xlu0 %1435
        %v1437 = vrot.slane %v1436, 4
        %v1438 = vadd.f32 %v1436, %v1437
        %v1439 = vrot.slane %v1438, 2
        %v1440 = vadd.f32 %v1438, %v1439
        %v1441 = vrot.slane %v1440, 1
        %v1442 = vadd.f32 %v1440, %v1441
        %s1443 = vtos %v1442
        %v1444 = vmul.f32 %v1372, %v1276
        %v1445 = vmul.f32 %v1373, %v1277
        %v1446 = vmul.f32 %v1374, %v1278
        %v1447 = vmul.f32 %v1375, %v1279
        %v1448 = vmul.f32 %v1376, %v1280
        %v1449 = vmul.f32 %v1377, %v1281
        %v1450 = vmul.f32 %v1378, %v1282
        %v1451 = vmul.f32 %v1379, %v1283
        %v1452 = vmul.f32 %v1380, %v1284
        %v1453 = vmul.f32 %v1381, %v1285
        %v1454 = vmul.f32 %v1382, %v1286
        %v1455 = vmul.f32 %v1383, %v1287
        %v1456 = vmul.f32 %v1384, %v1288
        %v1457 = vmul.f32 %v1385, %v1289
        %v1458 = vmul.f32 %v1386, %v1290
        %v1459 = vmul.f32 %v1387, %v1291
        %v1460 = vadd.f32 %v1444, %v1445
        %v1461 = vadd.f32 %v1460, %v1446
        %v1462 = vadd.f32 %v1461, %v1447
        %v1463 = vadd.f32 %v1462, %v1448
        %v1464 = vadd.f32 %v1463, %v1449
        %v1465 = vadd.f32 %v1464, %v1450
        %v1466 = vadd.f32 %v1465, %v1451
        %v1467 = vadd.f32 %v1466, %v1452
        %v1468 = vadd.f32 %v1467, %v1453
        %v1469 = vadd.f32 %v1468, %v1454
        %v1470 = vadd.f32 %v1469, %v1455
        %v1471 = vadd.f32 %v1470, %v1456
        %v1472 = vadd.f32 %v1471, %v1457
        %v1473 = vadd.f32 %v1472, %v1458
        %v1474 = vadd.f32 %v1473, %v1459
        %1475 = vadd.xlane.f32.xlu0 %v1474
        %v1476 = vpop.xlane.xlu0 %1475
        %v1477 = vrot.slane %v1476, 4
        %v1478 = vadd.f32 %v1476, %v1477
        %v1479 = vrot.slane %v1478, 2
        %v1480 = vadd.f32 %v1478, %v1479
        %v1481 = vrot.slane %v1480, 1
        %v1482 = vadd.f32 %v1480, %v1481
        %s1483 = vtos %v1482
        %v1484 = vmul.f32 %v1388, %v1292
        %v1485 = vmul.f32 %v1389, %v1293
        %v1486 = vmul.f32 %v1390, %v1294
        %v1487 = vmul.f32 %v1391, %v1295
        %v1488 = vmul.f32 %v1392, %v1296
        %v1489 = vmul.f32 %v1393, %v1297
        %v1490 = vmul.f32 %v1394, %v1298
        %v1491 = vmul.f32 %v1395, %v1299
        %v1492 = vmul.f32 %v1396, %v1300
        %v1493 = vmul.f32 %v1397, %v1301
        %v1494 = vmul.f32 %v1398, %v1302
        %v1495 = vmul.f32 %v1399, %v1303
        %v1496 = vmul.f32 %v1400, %v1304
        %v1497 = vmul.f32 %v1401, %v1305
        %v1498 = vmul.f32 %v1402, %v1306
        %v1499 = vmul.f32 %v1403, %v1307
        %v1500 = vadd.f32 %v1484, %v1485
        %v1501 = vadd.f32 %v1500, %v1486
        %v1502 = vadd.f32 %v1501, %v1487
        %v1503 = vadd.f32 %v1502, %v1488
        %v1504 = vadd.f32 %v1503, %v1489
        %v1505 = vadd.f32 %v1504, %v1490
        %v1506 = vadd.f32 %v1505, %v1491
        %v1507 = vadd.f32 %v1506, %v1492
        %v1508 = vadd.f32 %v1507, %v1493
        %v1509 = vadd.f32 %v1508, %v1494
        %v1510 = vadd.f32 %v1509, %v1495
        %v1511 = vadd.f32 %v1510, %v1496
        %v1512 = vadd.f32 %v1511, %v1497
        %v1513 = vadd.f32 %v1512, %v1498
        %v1514 = vadd.f32 %v1513, %v1499
        %1515 = vadd.xlane.f32.xlu0 %v1514
        %v1516 = vpop.xlane.xlu0 %1515
        %v1517 = vrot.slane %v1516, 4
        %v1518 = vadd.f32 %v1516, %v1517
        %v1519 = vrot.slane %v1518, 2
        %v1520 = vadd.f32 %v1518, %v1519
        %v1521 = vrot.slane %v1520, 1
        %v1522 = vadd.f32 %v1520, %v1521
        %s1523 = vtos %v1522
        %v1524 = vlaneseq
        %v1525 = vshrl.u32 %v1524, 7
        %v1526 = vld [vmem:[%s172] sm:$0xff]
        %vm1527 = vcmp.eq.s32.totalorder %v1525, 0
        %vm1528 = vcmp.eq.s32.totalorder %v1525, 1
        %vm1529 = vcmp.eq.s32.totalorder %v1525, 2
        %v1530 = vstv %s1523
        %v1531 = vsel %vm1529, %v1530, 0.0
        %v1532 = vstv %s1483
        %v1533 = vsel %vm1528, %v1532, %v1531
        %v1534 = vstv %s1443
        %v1535 = vsel %vm1527, %v1534, %v1533
        %v1536 = vadd.f32 %v1526, %v1535
        %1537 = vst [vmem:[%s172] sm:$0xff] %v1536
      $region40: #{bce_decorrelated_loss.1} parent=27 // pred_fallthru
        _
      %p1538 = scmp.lt.s32.totalorder %s17, 2
      %s1539 = scalar_select %p1538, %s17, 2
      %s1540 = smul.addr %s1539, 8
      %s1541 = scalar_lea.vmem %s2, %s1540
      // Predicated region
      $region41: #{bce_decorrelated_loss.1} parent=27 // pred_check
        %p1542 = pneg %p95
      $region42: #{bce_decorrelated_loss.1} parent=27 // pred_check_branch
        %1544 = sbr.rel (%p1542) target = $region44
      $region43: #{bce_decorrelated_loss.1} parent=27 // pred_region
        _
      $region44: #{bce_decorrelated_loss.1} parent=27 // pred_fallthru
        _
    $region28: #{bce_decorrelated_loss.1} parent=5 // pred_fallthru
      _
    %p1545 = scmp.le.s32.totalorder 2, %s8
    // Predicated region
    $region45: #{bce_decorrelated_loss.1} parent=5 // pred_check
      %p1546 = pneg %p1545
    $region46: #{bce_decorrelated_loss.1} parent=5 // pred_check_branch
      %1548 = sbr.rel (%p1546) target = $region48
    $region47: #{bce_decorrelated_loss.1} parent=5 // pred_region
      %s1549 = ssub.s32 %s8, 2
      // Predicated region
      $region49: #{bce_decorrelated_loss.1} parent=47 // pred_check
        %p1550 = pneg %p101
      $region50: #{bce_decorrelated_loss.1} parent=47 // pred_check_branch
        %1552 = sbr.rel (%p1550) target = $region52
      $region51: #{bce_decorrelated_loss.1} parent=47 // pred_region
        %p1553 = scmp.lt.s32.totalorder %s19, 2
        %s1554 = scalar_select %p1553, %s19, 2
        %s1555 = smul.addr %s1554, 8
        %s1556 = scalar_lea.vmem %s2, %s1555
      $region52: #{bce_decorrelated_loss.1} parent=47 // pred_fallthru
        _
    $region48: #{bce_decorrelated_loss.1} parent=5 // pred_fallthru
      _
  $region6: #{bce_decorrelated_loss.1} parent=0 // loop_footer
    %s12 = sadd.s32 1, %s8
  $region7: #{bce_decorrelated_loss.1} parent=0 // loop_footer_branch
    %7 = sbr.rel target = $region3
  $region8: #{bce_decorrelated_loss.1} parent=0 // loop_exit
    _

</llo_original>
